<compile_context>
chip_gen: v7x
topology: tpu7x:2x2x1
jax: 0.10.0
libtpu: 0.0.40
codegen_flags: <defaults>
</compile_context>

<pallas_src>
import jax
import jax.numpy as jnp
from jax.experimental import pallas as pl
from jax.experimental.pallas import tpu as pltpu


def _vq_kernel(x_ref, cb_ref, zq_ref, idx_ref):
    """One (batch image, pixel-tile) block, all channel groups at once.

    x_ref  : (D, TP)  input block: channels (all groups) on sublanes, pixels on lanes
    cb_ref : (D, K)   f32 codebooks: column k stacks every group's code-k vector
    zq_ref : (D, TP)  quantized output (feather dtype)
    idx_ref: (G, TP)  int32 nearest-code index per group
    """
    D, TP = x_ref.shape
    K = cb_ref.shape[1]
    G = idx_ref.shape[0]
    Cg = D // G

    # Lane chunking: one chunk's running-argmin state (x, best_dist, best_idx,
    # best_zq ~ 4 * D * 256 * 4B ~ 16 vregs) stays in vector registers across
    # the whole K loop instead of round-tripping VMEM every code.  Offsets are
    # Python ints -> every ref access below is a static slice.
    chunk = 256 if TP % 256 == 0 else 128
    num_chunks = TP // chunk

    cb = cb_ref[...]  # (D, K) f32, tiny, resident

    def group_dist_rep(sq):
        # (D, chunk) squared diffs -> per-group distance replicated over each
        # group's Cg sublanes -> (D, chunk).  Keeps every later compare/select
        # on full 8-sublane vregs instead of (Cg, chunk) / (1, chunk) slivers.
        rows = []
        for g in range(G):
            dist_g = jnp.sum(sq[g * Cg:(g + 1) * Cg, :], axis=0, keepdims=True)
            rows.append(jnp.broadcast_to(dist_g, (Cg, chunk)))
        return jnp.concatenate(rows, axis=0) if G > 1 else rows[0]

    for c in range(num_chunks):  # static unroll; each chunk's state dies at chunk end
        col = c * chunk
        # Load + cast the chunk once for all groups and all codes.
        x = x_ref[:, col:col + chunk].astype(jnp.float32)             # (D, chunk)

        # ---- peel code 0: initialise the running argmin from code 0 ----
        e0 = cb[:, 0:1]                                               # (D, 1)
        d0 = x - e0
        best_dist = group_dist_rep(d0 * d0)                           # (D, chunk), group-replicated
        best_idx = jnp.zeros((D, chunk), dtype=jnp.int32)
        best_zq = jnp.broadcast_to(e0, (D, chunk))

        # ---- running first-occurrence argmin over the remaining codes ----
        # Strict '<' keeps the earliest code on ties (== torch.argmin).
        for k in range(1, K):
            e_k = cb[:, k:k + 1]                                      # (D, 1)
            d = x - e_k                                               # full-vreg (D, chunk)
            dist = group_dist_rep(d * d)                              # (D, chunk)
            better = dist < best_dist                                 # (D, chunk), replicated per group
            best_dist = jnp.where(better, dist, best_dist)
            best_idx = jnp.where(better, jnp.int32(k), best_idx)
            best_zq = jnp.where(better, e_k, best_zq)                 # exact f32 codebook values

        zq_ref[:, col:col + chunk] = best_zq.astype(zq_ref.dtype)
        for g in range(G):  # row g*Cg of the replicated index == group g's index
            idx_ref[g:g + 1, col:col + chunk] = best_idx[g * Cg:g * Cg + 1, :]


def _pick_pixel_tile(hw_pad, n_images, max_lanes, min_grid_points):
    """Largest 128-multiple divisor of hw_pad (<= max_lanes) that still yields at
    least `min_grid_points` grid points (so both of v7x's TensorCores get work);
    falls back to the smallest candidate (most grid points) otherwise."""
    max_t = max(128, min(hw_pad, max_lanes))
    cands = [t for t in range(128, max_t + 1, 128) if hw_pad % t == 0]
    if not cands:  # hw_pad is always a multiple of 128 by construction
        return min(hw_pad, 128)
    for t in sorted(cands, reverse=True):
        if n_images * (hw_pad // t) >= min_grid_points:
            return t
    return cands[0]


def channel_group_vq_forward(feather, codebooks, *, max_pixels_per_block=4096,
                             min_grid_points=4):
    """feather: (N, D, H, W) NCHW; codebooks: (G, K, Cg) with D == G*Cg.

    Returns (reconstruction_feather, zq, code_index) matching the PyTorch
    module: shapes (N, D, H, W), (N, D, H, W), (N, G, H, W).
    # TODO(synk): PyTorch returns int64 code indices; int32 is TPU-native here.
    """
    N, D, H, W = feather.shape
    G, K, Cg = codebooks.shape
    assert D == G * Cg, "embedding_dim must equal group_num * group_size"
    HW = H * W

    # Lane-dense padding of the pixel axis: every store becomes a full,
    # unmasked vst and no untiled (D, HW) fallback block can exceed VMEM.
    # Large images pad to a multiple of 1024 so big (lane-dense) tiles exist
    # even for awkward HW; padded pixels are quantized and sliced off.
    lane_align = 1024 if HW >= 4096 else 128
    HW_pad = ((HW + lane_align - 1) // lane_align) * lane_align

    x = feather.reshape(N, D, HW)  # free reshape (no transpose)
    if HW_pad != HW:
        x = jnp.pad(x, ((0, 0), (0, 0), (0, HW_pad - HW)))

    TP = _pick_pixel_tile(HW_pad, N, max_pixels_per_block, min_grid_points)
    num_tiles = HW_pad // TP

    # Codebooks: (G, K, Cg) -> (D, K) f32 so column k stacks every group's
    # code-k vector along the channel (sublane) axis.  Tiny; resident in VMEM.
    cb = jnp.transpose(codebooks, (0, 2, 1)).reshape(D, K).astype(jnp.float32)

    zq_flat, idx_flat = pl.pallas_call(
        _vq_kernel,
        out_shape=(
            jax.ShapeDtypeStruct((N, D, HW_pad), feather.dtype),
            jax.ShapeDtypeStruct((N, G, HW_pad), jnp.int32),
        ),
        grid=(N, num_tiles),
        in_specs=[
            # x: one batch image, full channel axis on sublanes, pixel tile on lanes.
            # HBM blocks keep the input dtype (bf16 inputs DMA at half the bytes).
            pl.BlockSpec((None, D, TP), lambda n, t: (n, 0, t)),
            # codebooks: tiny, constant block index -> fetched once, resident.
            pl.BlockSpec((D, K), lambda n, t: (0, 0)),
        ],
        out_specs=(
            pl.BlockSpec((None, D, TP), lambda n, t: (n, 0, t)),
            pl.BlockSpec((None, G, TP), lambda n, t: (n, 0, t)),
        ),
        compiler_params=pltpu.CompilerParams(
            dimension_semantics=("parallel", "parallel"),
            vmem_limit_bytes=32 * 1024 * 1024,  # blocks are small on every generation
        ),
    )(x, cb)

    if HW_pad != HW:
        zq_flat = zq_flat[..., :HW]
        idx_flat = idx_flat[..., :HW]
    zq = zq_flat.reshape(N, D, H, W)
    code_index = idx_flat.reshape(N, G, H, W)
    # Forward value of feather + stop_grad(zq - feather) == zq.
    # TODO(synk): if autodiff is ever needed, re-introduce the straight-through
    # expression in the wrapper instead of aliasing zq.
    reconstruction_feather = zq
    return reconstruction_feather, zq, code_index


def _reference_forward(feather, codebooks):
    """Pure-JAX reference mirroring the PyTorch math (sanity check)."""
    N, D, H, W = feather.shape
    G, K, Cg = codebooks.shape
    zqs, idxs = [], []
    for g in range(G):
        xg = feather[:, g * Cg:(g + 1) * Cg]                                  # (N, Cg, H, W)
        e = codebooks[g]                                                      # (K, Cg)
        dist = jnp.sum((e.reshape(1, K, Cg, 1, 1) - xg.reshape(N, 1, Cg, H, W)) ** 2, axis=2)
        nn_idx = jnp.argmin(dist, axis=1)                                     # (N, H, W)
        zq = jnp.transpose(e[nn_idx], (0, 3, 1, 2))                           # (N, Cg, H, W)
        zqs.append(zq)
        idxs.append(nn_idx[:, None])
    zq = jnp.concatenate(zqs, axis=1)
    code_index = jnp.concatenate(idxs, axis=1).astype(jnp.int32)
    return zq, zq, code_index


def _run_case(key, N, H, W, embedding_dim, group_num, codebook_size, max_pixels_per_block):
    group_size = embedding_dim // group_num
    k_x, k_cb = jax.random.split(key)
    feather = jax.random.normal(k_x, (N, embedding_dim, H, W), dtype=jnp.float32)
    # nn.Embedding init in the module: uniform(-1/codebook_size, 1/codebook_size).
    codebooks = jax.random.uniform(
        k_cb, (group_num, codebook_size, group_size),
        minval=-1.0 / codebook_size, maxval=1.0 / codebook_size, dtype=jnp.float32)

    recon, zq, code_index = channel_group_vq_forward(
        feather, codebooks, max_pixels_per_block=max_pixels_per_block)
    jax.block_until_ready((recon, zq, code_index))

    r_recon, r_zq, r_idx = _reference_forward(feather, codebooks)
    assert recon.shape == (N, embedding_dim, H, W)
    assert zq.shape == (N, embedding_dim, H, W)
    assert code_index.shape == (N, group_num, H, W)
    assert jnp.allclose(zq, r_zq, atol=1e-5)
    assert jnp.allclose(recon, r_recon, atol=1e-5)
    assert jnp.array_equal(code_index, r_idx)


if __name__ == "__main__":
    # Module hyper-parameters (consistent with the module's __init__).
    embedding_dim = 16
    group_num = 4
    codebook_size = 16

    key = jax.random.PRNGKey(0)
    k1, k2, k3 = jax.random.split(key, 3)

    # Case 1: HW=64 -> padded to 128 lanes (lane-dense stores), grid (2, 1).
    _run_case(k1, N=2, H=8, W=8, embedding_dim=embedding_dim,
              group_num=group_num, codebook_size=codebook_size,
              max_pixels_per_block=4096)

    # Case 2: HW=256 -> TP=128 so the grid has >= 4 points (v7x 2-TC), grid (2, 2).
    _run_case(k2, N=2, H=16, W=16, embedding_dim=embedding_dim,
              group_num=group_num, codebook_size=codebook_size,
              max_pixels_per_block=4096)

    # Case 3: HW=1024 -> TP=512: two statically-unrolled 256-lane chunks per tile
    # (exercises the vreg-resident chunked running-argmin path), grid (2, 2).
    _run_case(k3, N=2, H=32, W=32, embedding_dim=embedding_dim,
              group_num=group_num, codebook_size=codebook_size,
              max_pixels_per_block=4096)

    print("KERNEL_OK")
</pallas_src>

<mosaic_0001>
module attributes {stable_mosaic.version = 11 : i64} {
  func.func @_vq_kernel(%arg0: i32, %arg1: i32, %arg2: memref<1x16x128xf32, #tpu.memory_space<vmem>>, %arg3: memref<16x16xf32, #tpu.memory_space<vmem>>, %arg4: memref<1x16x128xf32, #tpu.memory_space<vmem>>, %arg5: memref<1x4x128xi32, #tpu.memory_space<vmem>>) attributes {dimension_semantics = [#tpu.dimension_semantics<parallel>, #tpu.dimension_semantics<parallel>], iteration_bounds = array<i64: 2, 1>, scalar_prefetch = 0 : i64, scratch_operands = 0 : i64, tpu.core_type = #tpu.core_type<tc>, window_params = [{transform_indices = @transform_0, window_bounds = array<i64: 1, 16, 128>}, {pipeline_mode = #tpu.pipeline_mode<synchronous>, transform_indices = @transform_1, window_bounds = array<i64: 16, 16>}, {transform_indices = @transform_2, window_bounds = array<i64: 1, 16, 128>}, {transform_indices = @transform_3, window_bounds = array<i64: 1, 4, 128>}]} {
    %c0 = arith.constant 0 : index
    %c0_0 = arith.constant 0 : index
    %0 = vector.load %arg3[%c0, %c0_0] : memref<16x16xf32, #tpu.memory_space<vmem>>, vector<16x16xf32>
    %c0_1 = arith.constant 0 : index
    %c0_2 = arith.constant 0 : index
    %c0_3 = arith.constant 0 : index
    %1 = vector.load %arg2[%c0_1, %c0_2, %c0_3] : memref<1x16x128xf32, #tpu.memory_space<vmem>>, vector<1x16x128xf32>
    %2 = vector.shape_cast %1 : vector<1x16x128xf32> to vector<16x128xf32>
    %3 = vector.extract_strided_slice %0 {offsets = [0, 0], sizes = [16, 1], strides = [1, 1]} : vector<16x16xf32> to vector<16x1xf32>
    %4 = vector.broadcast %3 : vector<16x1xf32> to vector<16x128xf32>
    %5 = arith.subf %2, %4 : vector<16x128xf32>
    %6 = arith.mulf %5, %5 : vector<16x128xf32>
    %7 = vector.extract_strided_slice %6 {offsets = [0, 0], sizes = [4, 128], strides = [1, 1]} : vector<16x128xf32> to vector<4x128xf32>
    %cst = arith.constant dense<0.000000e+00> : vector<128xf32>
    %8 = vector.multi_reduction <add>, %7, %cst [0] : vector<4x128xf32> to vector<128xf32>
    %9 = vector.shape_cast %8 : vector<128xf32> to vector<1x128xf32>
    %10 = vector.shape_cast %9 : vector<1x128xf32> to vector<1x128xf32>
    %11 = vector.broadcast %10 : vector<1x128xf32> to vector<4x128xf32>
    %12 = vector.extract_strided_slice %6 {offsets = [4, 0], sizes = [4, 128], strides = [1, 1]} : vector<16x128xf32> to vector<4x128xf32>
    %cst_4 = arith.constant dense<0.000000e+00> : vector<128xf32>
    %13 = vector.multi_reduction <add>, %12, %cst_4 [0] : vector<4x128xf32> to vector<128xf32>
    %14 = vector.shape_cast %13 : vector<128xf32> to vector<1x128xf32>
    %15 = vector.shape_cast %14 : vector<1x128xf32> to vector<1x128xf32>
    %16 = vector.broadcast %15 : vector<1x128xf32> to vector<4x128xf32>
    %17 = vector.extract_strided_slice %6 {offsets = [8, 0], sizes = [4, 128], strides = [1, 1]} : vector<16x128xf32> to vector<4x128xf32>
    %cst_5 = arith.constant dense<0.000000e+00> : vector<128xf32>
    %18 = vector.multi_reduction <add>, %17, %cst_5 [0] : vector<4x128xf32> to vector<128xf32>
    %19 = vector.shape_cast %18 : vector<128xf32> to vector<1x128xf32>
    %20 = vector.shape_cast %19 : vector<1x128xf32> to vector<1x128xf32>
    %21 = vector.broadcast %20 : vector<1x128xf32> to vector<4x128xf32>
    %22 = vector.extract_strided_slice %6 {offsets = [12, 0], sizes = [4, 128], strides = [1, 1]} : vector<16x128xf32> to vector<4x128xf32>
    %cst_6 = arith.constant dense<0.000000e+00> : vector<128xf32>
    %23 = vector.multi_reduction <add>, %22, %cst_6 [0] : vector<4x128xf32> to vector<128xf32>
    %24 = vector.shape_cast %23 : vector<128xf32> to vector<1x128xf32>
    %25 = vector.shape_cast %24 : vector<1x128xf32> to vector<1x128xf32>
    %26 = vector.broadcast %25 : vector<1x128xf32> to vector<4x128xf32>
    %27 = tpu.concatenate %11, %16, %21, %26 in 0 : vector<4x128xf32>, vector<4x128xf32>, vector<4x128xf32>, vector<4x128xf32> -> vector<16x128xf32>
    %c0_i32 = arith.constant 0 : i32
    %28 = vector.broadcast %c0_i32 : i32 to vector<16x128xi32>
    %29 = vector.shape_cast %3 : vector<16x1xf32> to vector<16x1xf32>
    %30 = vector.broadcast %29 : vector<16x1xf32> to vector<16x128xf32>
    %31 = vector.extract_strided_slice %0 {offsets = [0, 1], sizes = [16, 1], strides = [1, 1]} : vector<16x16xf32> to vector<16x1xf32>
    %32 = vector.broadcast %31 : vector<16x1xf32> to vector<16x128xf32>
    %33 = arith.subf %2, %32 : vector<16x128xf32>
    %34 = arith.mulf %33, %33 : vector<16x128xf32>
    %35 = vector.extract_strided_slice %34 {offsets = [0, 0], sizes = [4, 128], strides = [1, 1]} : vector<16x128xf32> to vector<4x128xf32>
    %cst_7 = arith.constant dense<0.000000e+00> : vector<128xf32>
    %36 = vector.multi_reduction <add>, %35, %cst_7 [0] : vector<4x128xf32> to vector<128xf32>
    %37 = vector.shape_cast %36 : vector<128xf32> to vector<1x128xf32>
    %38 = vector.shape_cast %37 : vector<1x128xf32> to vector<1x128xf32>
    %39 = vector.broadcast %38 : vector<1x128xf32> to vector<4x128xf32>
    %40 = vector.extract_strided_slice %34 {offsets = [4, 0], sizes = [4, 128], strides = [1, 1]} : vector<16x128xf32> to vector<4x128xf32>
    %cst_8 = arith.constant dense<0.000000e+00> : vector<128xf32>
    %41 = vector.multi_reduction <add>, %40, %cst_8 [0] : vector<4x128xf32> to vector<128xf32>
    %42 = vector.shape_cast %41 : vector<128xf32> to vector<1x128xf32>
    %43 = vector.shape_cast %42 : vector<1x128xf32> to vector<1x128xf32>
    %44 = vector.broadcast %43 : vector<1x128xf32> to vector<4x128xf32>
    %45 = vector.extract_strided_slice %34 {offsets = [8, 0], sizes = [4, 128], strides = [1, 1]} : vector<16x128xf32> to vector<4x128xf32>
    %cst_9 = arith.constant dense<0.000000e+00> : vector<128xf32>
    %46 = vector.multi_reduction <add>, %45, %cst_9 [0] : vector<4x128xf32> to vector<128xf32>
    %47 = vector.shape_cast %46 : vector<128xf32> to vector<1x128xf32>
    %48 = vector.shape_cast %47 : vector<1x128xf32> to vector<1x128xf32>
    %49 = vector.broadcast %48 : vector<1x128xf32> to vector<4x128xf32>
    %50 = vector.extract_strided_slice %34 {offsets = [12, 0], sizes = [4, 128], strides = [1, 1]} : vector<16x128xf32> to vector<4x128xf32>
    %cst_10 = arith.constant dense<0.000000e+00> : vector<128xf32>
    %51 = vector.multi_reduction <add>, %50, %cst_10 [0] : vector<4x128xf32> to vector<128xf32>
    %52 = vector.shape_cast %51 : vector<128xf32> to vector<1x128xf32>
    %53 = vector.shape_cast %52 : vector<1x128xf32> to vector<1x128xf32>
    %54 = vector.broadcast %53 : vector<1x128xf32> to vector<4x128xf32>
    %55 = tpu.concatenate %39, %44, %49, %54 in 0 : vector<4x128xf32>, vector<4x128xf32>, vector<4x128xf32>, vector<4x128xf32> -> vector<16x128xf32>
    %56 = arith.cmpf olt, %55, %27 : vector<16x128xf32>
    %57 = arith.select %56, %55, %27 : vector<16x128xi1>, vector<16x128xf32>
    %c1_i32 = arith.constant 1 : i32
    %58 = vector.broadcast %c1_i32 : i32 to vector<16x128xi32>
    %59 = arith.select %56, %58, %28 : vector<16x128xi1>, vector<16x128xi32>
    %60 = vector.shape_cast %31 : vector<16x1xf32> to vector<16x1xf32>
    %61 = vector.broadcast %60 : vector<16x1xf32> to vector<16x128xf32>
    %62 = arith.select %56, %61, %30 : vector<16x128xi1>, vector<16x128xf32>
    %63 = vector.extract_strided_slice %0 {offsets = [0, 2], sizes = [16, 1], strides = [1, 1]} : vector<16x16xf32> to vector<16x1xf32>
    %64 = vector.broadcast %63 : vector<16x1xf32> to vector<16x128xf32>
    %65 = arith.subf %2, %64 : vector<16x128xf32>
    %66 = arith.mulf %65, %65 : vector<16x128xf32>
    %67 = vector.extract_strided_slice %66 {offsets = [0, 0], sizes = [4, 128], strides = [1, 1]} : vector<16x128xf32> to vector<4x128xf32>
    %cst_11 = arith.constant dense<0.000000e+00> : vector<128xf32>
    %68 = vector.multi_reduction <add>, %67, %cst_11 [0] : vector<4x128xf32> to vector<128xf32>
    %69 = vector.shape_cast %68 : vector<128xf32> to vector<1x128xf32>
    %70 = vector.shape_cast %69 : vector<1x128xf32> to vector<1x128xf32>
    %71 = vector.broadcast %70 : vector<1x128xf32> to vector<4x128xf32>
    %72 = vector.extract_strided_slice %66 {offsets = [4, 0], sizes = [4, 128], strides = [1, 1]} : vector<16x128xf32> to vector<4x128xf32>
    %cst_12 = arith.constant dense<0.000000e+00> : vector<128xf32>
    %73 = vector.multi_reduction <add>, %72, %cst_12 [0] : vector<4x128xf32> to vector<128xf32>
    %74 = vector.shape_cast %73 : vector<128xf32> to vector<1x128xf32>
    %75 = vector.shape_cast %74 : vector<1x128xf32> to vector<1x128xf32>
    %76 = vector.broadcast %75 : vector<1x128xf32> to vector<4x128xf32>
    %77 = vector.extract_strided_slice %66 {offsets = [8, 0], sizes = [4, 128], strides = [1, 1]} : vector<16x128xf32> to vector<4x128xf32>
    %cst_13 = arith.constant dense<0.000000e+00> : vector<128xf32>
    %78 = vector.multi_reduction <add>, %77, %cst_13 [0] : vector<4x128xf32> to vector<128xf32>
    %79 = vector.shape_cast %78 : vector<128xf32> to vector<1x128xf32>
    %80 = vector.shape_cast %79 : vector<1x128xf32> to vector<1x128xf32>
    %81 = vector.broadcast %80 : vector<1x128xf32> to vector<4x128xf32>
    %82 = vector.extract_strided_slice %66 {offsets = [12, 0], sizes = [4, 128], strides = [1, 1]} : vector<16x128xf32> to vector<4x128xf32>
    %cst_14 = arith.constant dense<0.000000e+00> : vector<128xf32>
    %83 = vector.multi_reduction <add>, %82, %cst_14 [0] : vector<4x128xf32> to vector<128xf32>
    %84 = vector.shape_cast %83 : vector<128xf32> to vector<1x128xf32>
    %85 = vector.shape_cast %84 : vector<1x128xf32> to vector<1x128xf32>
    %86 = vector.broadcast %85 : vector<1x128xf32> to vector<4x128xf32>
    %87 = tpu.concatenate %71, %76, %81, %86 in 0 : vector<4x128xf32>, vector<4x128xf32>, vector<4x128xf32>, vector<4x128xf32> -> vector<16x128xf32>
    %88 = arith.cmpf olt, %87, %57 : vector<16x128xf32>
    %89 = arith.select %88, %87, %57 : vector<16x128xi1>, vector<16x128xf32>
    %c2_i32 = arith.constant 2 : i32
    %90 = vector.broadcast %c2_i32 : i32 to vector<16x128xi32>
    %91 = arith.select %88, %90, %59 : vector<16x128xi1>, vector<16x128xi32>
    %92 = vector.shape_cast %63 : vector<16x1xf32> to vector<16x1xf32>
    %93 = vector.broadcast %92 : vector<16x1xf32> to vector<16x128xf32>
    %94 = arith.select %88, %93, %62 : vector<16x128xi1>, vector<16x128xf32>
    %95 = vector.extract_strided_slice %0 {offsets = [0, 3], sizes = [16, 1], strides = [1, 1]} : vector<16x16xf32> to vector<16x1xf32>
    %96 = vector.broadcast %95 : vector<16x1xf32> to vector<16x128xf32>
    %97 = arith.subf %2, %96 : vector<16x128xf32>
    %98 = arith.mulf %97, %97 : vector<16x128xf32>
    %99 = vector.extract_strided_slice %98 {offsets = [0, 0], sizes = [4, 128], strides = [1, 1]} : vector<16x128xf32> to vector<4x128xf32>
    %cst_15 = arith.constant dense<0.000000e+00> : vector<128xf32>
    %100 = vector.multi_reduction <add>, %99, %cst_15 [0] : vector<4x128xf32> to vector<128xf32>
    %101 = vector.shape_cast %100 : vector<128xf32> to vector<1x128xf32>
    %102 = vector.shape_cast %101 : vector<1x128xf32> to vector<1x128xf32>
    %103 = vector.broadcast %102 : vector<1x128xf32> to vector<4x128xf32>
    %104 = vector.extract_strided_slice %98 {offsets = [4, 0], sizes = [4, 128], strides = [1, 1]} : vector<16x128xf32> to vector<4x128xf32>
    %cst_16 = arith.constant dense<0.000000e+00> : vector<128xf32>
    %105 = vector.multi_reduction <add>, %104, %cst_16 [0] : vector<4x128xf32> to vector<128xf32>
    %106 = vector.shape_cast %105 : vector<128xf32> to vector<1x128xf32>
    %107 = vector.shape_cast %106 : vector<1x128xf32> to vector<1x128xf32>
    %108 = vector.broadcast %107 : vector<1x128xf32> to vector<4x128xf32>
    %109 = vector.extract_strided_slice %98 {offsets = [8, 0], sizes = [4, 128], strides = [1, 1]} : vector<16x128xf32> to vector<4x128xf32>
    %cst_17 = arith.constant dense<0.000000e+00> : vector<128xf32>
    %110 = vector.multi_reduction <add>, %109, %cst_17 [0] : vector<4x128xf32> to vector<128xf32>
    %111 = vector.shape_cast %110 : vector<128xf32> to vector<1x128xf32>
    %112 = vector.shape_cast %111 : vector<1x128xf32> to vector<1x128xf32>
    %113 = vector.broadcast %112 : vector<1x128xf32> to vector<4x128xf32>
    %114 = vector.extract_strided_slice %98 {offsets = [12, 0], sizes = [4, 128], strides = [1, 1]} : vector<16x128xf32> to vector<4x128xf32>
    %cst_18 = arith.constant dense<0.000000e+00> : vector<128xf32>
    %115 = vector.multi_reduction <add>, %114, %cst_18 [0] : vector<4x128xf32> to vector<128xf32>
    %116 = vector.shape_cast %115 : vector<128xf32> to vector<1x128xf32>
    %117 = vector.shape_cast %116 : vector<1x128xf32> to vector<1x128xf32>
    %118 = vector.broadcast %117 : vector<1x128xf32> to vector<4x128xf32>
    %119 = tpu.concatenate %103, %108, %113, %118 in 0 : vector<4x128xf32>, vector<4x128xf32>, vector<4x128xf32>, vector<4x128xf32> -> vector<16x128xf32>
    %120 = arith.cmpf olt, %119, %89 : vector<16x128xf32>
    %121 = arith.select %120, %119, %89 : vector<16x128xi1>, vector<16x128xf32>
    %c3_i32 = arith.constant 3 : i32
    %122 = vector.broadcast %c3_i32 : i32 to vector<16x128xi32>
    %123 = arith.select %120, %122, %91 : vector<16x128xi1>, vector<16x128xi32>
    %124 = vector.shape_cast %95 : vector<16x1xf32> to vector<16x1xf32>
    %125 = vector.broadcast %124 : vector<16x1xf32> to vector<16x128xf32>
    %126 = arith.select %120, %125, %94 : vector<16x128xi1>, vector<16x128xf32>
    %127 = vector.extract_strided_slice %0 {offsets = [0, 4], sizes = [16, 1], strides = [1, 1]} : vector<16x16xf32> to vector<16x1xf32>
    %128 = vector.broadcast %127 : vector<16x1xf32> to vector<16x128xf32>
    %129 = arith.subf %2, %128 : vector<16x128xf32>
    %130 = arith.mulf %129, %129 : vector<16x128xf32>
    %131 = vector.extract_strided_slice %130 {offsets = [0, 0], sizes = [4, 128], strides = [1, 1]} : vector<16x128xf32> to vector<4x128xf32>
    %cst_19 = arith.constant dense<0.000000e+00> : vector<128xf32>
    %132 = vector.multi_reduction <add>, %131, %cst_19 [0] : vector<4x128xf32> to vector<128xf32>
    %133 = vector.shape_cast %132 : vector<128xf32> to vector<1x128xf32>
    %134 = vector.shape_cast %133 : vector<1x128xf32> to vector<1x128xf32>
    %135 = vector.broadcast %134 : vector<1x128xf32> to vector<4x128xf32>
    %136 = vector.extract_strided_slice %130 {offsets = [4, 0], sizes = [4, 128], strides = [1, 1]} : vector<16x128xf32> to vector<4x128xf32>
    %cst_20 = arith.constant dense<0.000000e+00> : vector<128xf32>
    %137 = vector.multi_reduction <add>, %136, %cst_20 [0] : vector<4x128xf32> to vector<128xf32>
    %138 = vector.shape_cast %137 : vector<128xf32> to vector<1x128xf32>
    %139 = vector.shape_cast %138 : vector<1x128xf32> to vector<1x128xf32>
    %140 = vector.broadcast %139 : vector<1x128xf32> to vector<4x128xf32>
    %141 = vector.extract_strided_slice %130 {offsets = [8, 0], sizes = [4, 128], strides = [1, 1]} : vector<16x128xf32> to vector<4x128xf32>
    %cst_21 = arith.constant dense<0.000000e+00> : vector<128xf32>
    %142 = vector.multi_reduction <add>, %141, %cst_21 [0] : vector<4x128xf32> to vector<128xf32>
    %143 = vector.shape_cast %142 : vector<128xf32> to vector<1x128xf32>
    %144 = vector.shape_cast %143 : vector<1x128xf32> to vector<1x128xf32>
    %145 = vector.broadcast %144 : vector<1x128xf32> to vector<4x128xf32>
    %146 = vector.extract_strided_slice %130 {offsets = [12, 0], sizes = [4, 128], strides = [1, 1]} : vector<16x128xf32> to vector<4x128xf32>
    %cst_22 = arith.constant dense<0.000000e+00> : vector<128xf32>
    %147 = vector.multi_reduction <add>, %146, %cst_22 [0] : vector<4x128xf32> to vector<128xf32>
    %148 = vector.shape_cast %147 : vector<128xf32> to vector<1x128xf32>
    %149 = vector.shape_cast %148 : vector<1x128xf32> to vector<1x128xf32>
    %150 = vector.broadcast %149 : vector<1x128xf32> to vector<4x128xf32>
    %151 = tpu.concatenate %135, %140, %145, %150 in 0 : vector<4x128xf32>, vector<4x128xf32>, vector<4x128xf32>, vector<4x128xf32> -> vector<16x128xf32>
    %152 = arith.cmpf olt, %151, %121 : vector<16x128xf32>
    %153 = arith.select %152, %151, %121 : vector<16x128xi1>, vector<16x128xf32>
    %c4_i32 = arith.constant 4 : i32
    %154 = vector.broadcast %c4_i32 : i32 to vector<16x128xi32>
    %155 = arith.select %152, %154, %123 : vector<16x128xi1>, vector<16x128xi32>
    %156 = vector.shape_cast %127 : vector<16x1xf32> to vector<16x1xf32>
    %157 = vector.broadcast %156 : vector<16x1xf32> to vector<16x128xf32>
    %158 = arith.select %152, %157, %126 : vector<16x128xi1>, vector<16x128xf32>
    %159 = vector.extract_strided_slice %0 {offsets = [0, 5], sizes = [16, 1], strides = [1, 1]} : vector<16x16xf32> to vector<16x1xf32>
    %160 = vector.broadcast %159 : vector<16x1xf32> to vector<16x128xf32>
    %161 = arith.subf %2, %160 : vector<16x128xf32>
    %162 = arith.mulf %161, %161 : vector<16x128xf32>
    %163 = vector.extract_strided_slice %162 {offsets = [0, 0], sizes = [4, 128], strides = [1, 1]} : vector<16x128xf32> to vector<4x128xf32>
    %cst_23 = arith.constant dense<0.000000e+00> : vector<128xf32>
    %164 = vector.multi_reduction <add>, %163, %cst_23 [0] : vector<4x128xf32> to vector<128xf32>
    %165 = vector.shape_cast %164 : vector<128xf32> to vector<1x128xf32>
    %166 = vector.shape_cast %165 : vector<1x128xf32> to vector<1x128xf32>
    %167 = vector.broadcast %166 : vector<1x128xf32> to vector<4x128xf32>
    %168 = vector.extract_strided_slice %162 {offsets = [4, 0], sizes = [4, 128], strides = [1, 1]} : vector<16x128xf32> to vector<4x128xf32>
    %cst_24 = arith.constant dense<0.000000e+00> : vector<128xf32>
    %169 = vector.multi_reduction <add>, %168, %cst_24 [0] : vector<4x128xf32> to vector<128xf32>
    %170 = vector.shape_cast %169 : vector<128xf32> to vector<1x128xf32>
    %171 = vector.shape_cast %170 : vector<1x128xf32> to vector<1x128xf32>
    %172 = vector.broadcast %171 : vector<1x128xf32> to vector<4x128xf32>
    %173 = vector.extract_strided_slice %162 {offsets = [8, 0], sizes = [4, 128], strides = [1, 1]} : vector<16x128xf32> to vector<4x128xf32>
    %cst_25 = arith.constant dense<0.000000e+00> : vector<128xf32>
    %174 = vector.multi_reduction <add>, %173, %cst_25 [0] : vector<4x128xf32> to vector<128xf32>
    %175 = vector.shape_cast %174 : vector<128xf32> to vector<1x128xf32>
    %176 = vector.shape_cast %175 : vector<1x128xf32> to vector<1x128xf32>
    %177 = vector.broadcast %176 : vector<1x128xf32> to vector<4x128xf32>
    %178 = vector.extract_strided_slice %162 {offsets = [12, 0], sizes = [4, 128], strides = [1, 1]} : vector<16x128xf32> to vector<4x128xf32>
    %cst_26 = arith.constant dense<0.000000e+00> : vector<128xf32>
    %179 = vector.multi_reduction <add>, %178, %cst_26 [0] : vector<4x128xf32> to vector<128xf32>
    %180 = vector.shape_cast %179 : vector<128xf32> to vector<1x128xf32>
    %181 = vector.shape_cast %180 : vector<1x128xf32> to vector<1x128xf32>
    %182 = vector.broadcast %181 : vector<1x128xf32> to vector<4x128xf32>
    %183 = tpu.concatenate %167, %172, %177, %182 in 0 : vector<4x128xf32>, vector<4x128xf32>, vector<4x128xf32>, vector<4x128xf32> -> vector<16x128xf32>
    %184 = arith.cmpf olt, %183, %153 : vector<16x128xf32>
    %185 = arith.select %184, %183, %153 : vector<16x128xi1>, vector<16x128xf32>
    %c5_i32 = arith.constant 5 : i32
    %186 = vector.broadcast %c5_i32 : i32 to vector<16x128xi32>
    %187 = arith.select %184, %186, %155 : vector<16x128xi1>, vector<16x128xi32>
    %188 = vector.shape_cast %159 : vector<16x1xf32> to vector<16x1xf32>
    %189 = vector.broadcast %188 : vector<16x1xf32> to vector<16x128xf32>
    %190 = arith.select %184, %189, %158 : vector<16x128xi1>, vector<16x128xf32>
    %191 = vector.extract_strided_slice %0 {offsets = [0, 6], sizes = [16, 1], strides = [1, 1]} : vector<16x16xf32> to vector<16x1xf32>
    %192 = vector.broadcast %191 : vector<16x1xf32> to vector<16x128xf32>
    %193 = arith.subf %2, %192 : vector<16x128xf32>
    %194 = arith.mulf %193, %193 : vector<16x128xf32>
    %195 = vector.extract_strided_slice %194 {offsets = [0, 0], sizes = [4, 128], strides = [1, 1]} : vector<16x128xf32> to vector<4x128xf32>
    %cst_27 = arith.constant dense<0.000000e+00> : vector<128xf32>
    %196 = vector.multi_reduction <add>, %195, %cst_27 [0] : vector<4x128xf32> to vector<128xf32>
    %197 = vector.shape_cast %196 : vector<128xf32> to vector<1x128xf32>
    %198 = vector.shape_cast %197 : vector<1x128xf32> to vector<1x128xf32>
    %199 = vector.broadcast %198 : vector<1x128xf32> to vector<4x128xf32>
    %200 = vector.extract_strided_slice %194 {offsets = [4, 0], sizes = [4, 128], strides = [1, 1]} : vector<16x128xf32> to vector<4x128xf32>
    %cst_28 = arith.constant dense<0.000000e+00> : vector<128xf32>
    %201 = vector.multi_reduction <add>, %200, %cst_28 [0] : vector<4x128xf32> to vector<128xf32>
    %202 = vector.shape_cast %201 : vector<128xf32> to vector<1x128xf32>
    %203 = vector.shape_cast %202 : vector<1x128xf32> to vector<1x128xf32>
    %204 = vector.broadcast %203 : vector<1x128xf32> to vector<4x128xf32>
    %205 = vector.extract_strided_slice %194 {offsets = [8, 0], sizes = [4, 128], strides = [1, 1]} : vector<16x128xf32> to vector<4x128xf32>
    %cst_29 = arith.constant dense<0.000000e+00> : vector<128xf32>
    %206 = vector.multi_reduction <add>, %205, %cst_29 [0] : vector<4x128xf32> to vector<128xf32>
    %207 = vector.shape_cast %206 : vector<128xf32> to vector<1x128xf32>
    %208 = vector.shape_cast %207 : vector<1x128xf32> to vector<1x128xf32>
    %209 = vector.broadcast %208 : vector<1x128xf32> to vector<4x128xf32>
    %210 = vector.extract_strided_slice %194 {offsets = [12, 0], sizes = [4, 128], strides = [1, 1]} : vector<16x128xf32> to vector<4x128xf32>
    %cst_30 = arith.constant dense<0.000000e+00> : vector<128xf32>
    %211 = vector.multi_reduction <add>, %210, %cst_30 [0] : vector<4x128xf32> to vector<128xf32>
    %212 = vector.shape_cast %211 : vector<128xf32> to vector<1x128xf32>
    %213 = vector.shape_cast %212 : vector<1x128xf32> to vector<1x128xf32>
    %214 = vector.broadcast %213 : vector<1x128xf32> to vector<4x128xf32>
    %215 = tpu.concatenate %199, %204, %209, %214 in 0 : vector<4x128xf32>, vector<4x128xf32>, vector<4x128xf32>, vector<4x128xf32> -> vector<16x128xf32>
    %216 = arith.cmpf olt, %215, %185 : vector<16x128xf32>
    %217 = arith.select %216, %215, %185 : vector<16x128xi1>, vector<16x128xf32>
    %c6_i32 = arith.constant 6 : i32
    %218 = vector.broadcast %c6_i32 : i32 to vector<16x128xi32>
    %219 = arith.select %216, %218, %187 : vector<16x128xi1>, vector<16x128xi32>
    %220 = vector.shape_cast %191 : vector<16x1xf32> to vector<16x1xf32>
    %221 = vector.broadcast %220 : vector<16x1xf32> to vector<16x128xf32>
    %222 = arith.select %216, %221, %190 : vector<16x128xi1>, vector<16x128xf32>
    %223 = vector.extract_strided_slice %0 {offsets = [0, 7], sizes = [16, 1], strides = [1, 1]} : vector<16x16xf32> to vector<16x1xf32>
    %224 = vector.broadcast %223 : vector<16x1xf32> to vector<16x128xf32>
    %225 = arith.subf %2, %224 : vector<16x128xf32>
    %226 = arith.mulf %225, %225 : vector<16x128xf32>
    %227 = vector.extract_strided_slice %226 {offsets = [0, 0], sizes = [4, 128], strides = [1, 1]} : vector<16x128xf32> to vector<4x128xf32>
    %cst_31 = arith.constant dense<0.000000e+00> : vector<128xf32>
    %228 = vector.multi_reduction <add>, %227, %cst_31 [0] : vector<4x128xf32> to vector<128xf32>
    %229 = vector.shape_cast %228 : vector<128xf32> to vector<1x128xf32>
    %230 = vector.shape_cast %229 : vector<1x128xf32> to vector<1x128xf32>
    %231 = vector.broadcast %230 : vector<1x128xf32> to vector<4x128xf32>
    %232 = vector.extract_strided_slice %226 {offsets = [4, 0], sizes = [4, 128], strides = [1, 1]} : vector<16x128xf32> to vector<4x128xf32>
    %cst_32 = arith.constant dense<0.000000e+00> : vector<128xf32>
    %233 = vector.multi_reduction <add>, %232, %cst_32 [0] : vector<4x128xf32> to vector<128xf32>
    %234 = vector.shape_cast %233 : vector<128xf32> to vector<1x128xf32>
    %235 = vector.shape_cast %234 : vector<1x128xf32> to vector<1x128xf32>
    %236 = vector.broadcast %235 : vector<1x128xf32> to vector<4x128xf32>
    %237 = vector.extract_strided_slice %226 {offsets = [8, 0], sizes = [4, 128], strides = [1, 1]} : vector<16x128xf32> to vector<4x128xf32>
    %cst_33 = arith.constant dense<0.000000e+00> : vector<128xf32>
    %238 = vector.multi_reduction <add>, %237, %cst_33 [0] : vector<4x128xf32> to vector<128xf32>
    %239 = vector.shape_cast %238 : vector<128xf32> to vector<1x128xf32>
    %240 = vector.shape_cast %239 : vector<1x128xf32> to vector<1x128xf32>
    %241 = vector.broadcast %240 : vector<1x128xf32> to vector<4x128xf32>
    %242 = vector.extract_strided_slice %226 {offsets = [12, 0], sizes = [4, 128], strides = [1, 1]} : vector<16x128xf32> to vector<4x128xf32>
    %cst_34 = arith.constant dense<0.000000e+00> : vector<128xf32>
    %243 = vector.multi_reduction <add>, %242, %cst_34 [0] : vector<4x128xf32> to vector<128xf32>
    %244 = vector.shape_cast %243 : vector<128xf32> to vector<1x128xf32>
    %245 = vector.shape_cast %244 : vector<1x128xf32> to vector<1x128xf32>
    %246 = vector.broadcast %245 : vector<1x128xf32> to vector<4x128xf32>
    %247 = tpu.concatenate %231, %236, %241, %246 in 0 : vector<4x128xf32>, vector<4x128xf32>, vector<4x128xf32>, vector<4x128xf32> -> vector<16x128xf32>
    %248 = arith.cmpf olt, %247, %217 : vector<16x128xf32>
    %249 = arith.select %248, %247, %217 : vector<16x128xi1>, vector<16x128xf32>
    %c7_i32 = arith.constant 7 : i32
    %250 = vector.broadcast %c7_i32 : i32 to vector<16x128xi32>
    %251 = arith.select %248, %250, %219 : vector<16x128xi1>, vector<16x128xi32>
    %252 = vector.shape_cast %223 : vector<16x1xf32> to vector<16x1xf32>
    %253 = vector.broadcast %252 : vector<16x1xf32> to vector<16x128xf32>
    %254 = arith.select %248, %253, %222 : vector<16x128xi1>, vector<16x128xf32>
    %255 = vector.extract_strided_slice %0 {offsets = [0, 8], sizes = [16, 1], strides = [1, 1]} : vector<16x16xf32> to vector<16x1xf32>
    %256 = vector.broadcast %255 : vector<16x1xf32> to vector<16x128xf32>
    %257 = arith.subf %2, %256 : vector<16x128xf32>
    %258 = arith.mulf %257, %257 : vector<16x128xf32>
    %259 = vector.extract_strided_slice %258 {offsets = [0, 0], sizes = [4, 128], strides = [1, 1]} : vector<16x128xf32> to vector<4x128xf32>
    %cst_35 = arith.constant dense<0.000000e+00> : vector<128xf32>
    %260 = vector.multi_reduction <add>, %259, %cst_35 [0] : vector<4x128xf32> to vector<128xf32>
    %261 = vector.shape_cast %260 : vector<128xf32> to vector<1x128xf32>
    %262 = vector.shape_cast %261 : vector<1x128xf32> to vector<1x128xf32>
    %263 = vector.broadcast %262 : vector<1x128xf32> to vector<4x128xf32>
    %264 = vector.extract_strided_slice %258 {offsets = [4, 0], sizes = [4, 128], strides = [1, 1]} : vector<16x128xf32> to vector<4x128xf32>
    %cst_36 = arith.constant dense<0.000000e+00> : vector<128xf32>
    %265 = vector.multi_reduction <add>, %264, %cst_36 [0] : vector<4x128xf32> to vector<128xf32>
    %266 = vector.shape_cast %265 : vector<128xf32> to vector<1x128xf32>
    %267 = vector.shape_cast %266 : vector<1x128xf32> to vector<1x128xf32>
    %268 = vector.broadcast %267 : vector<1x128xf32> to vector<4x128xf32>
    %269 = vector.extract_strided_slice %258 {offsets = [8, 0], sizes = [4, 128], strides = [1, 1]} : vector<16x128xf32> to vector<4x128xf32>
    %cst_37 = arith.constant dense<0.000000e+00> : vector<128xf32>
    %270 = vector.multi_reduction <add>, %269, %cst_37 [0] : vector<4x128xf32> to vector<128xf32>
    %271 = vector.shape_cast %270 : vector<128xf32> to vector<1x128xf32>
    %272 = vector.shape_cast %271 : vector<1x128xf32> to vector<1x128xf32>
    %273 = vector.broadcast %272 : vector<1x128xf32> to vector<4x128xf32>
    %274 = vector.extract_strided_slice %258 {offsets = [12, 0], sizes = [4, 128], strides = [1, 1]} : vector<16x128xf32> to vector<4x128xf32>
    %cst_38 = arith.constant dense<0.000000e+00> : vector<128xf32>
    %275 = vector.multi_reduction <add>, %274, %cst_38 [0] : vector<4x128xf32> to vector<128xf32>
    %276 = vector.shape_cast %275 : vector<128xf32> to vector<1x128xf32>
    %277 = vector.shape_cast %276 : vector<1x128xf32> to vector<1x128xf32>
    %278 = vector.broadcast %277 : vector<1x128xf32> to vector<4x128xf32>
    %279 = tpu.concatenate %263, %268, %273, %278 in 0 : vector<4x128xf32>, vector<4x128xf32>, vector<4x128xf32>, vector<4x128xf32> -> vector<16x128xf32>
    %280 = arith.cmpf olt, %279, %249 : vector<16x128xf32>
    %281 = arith.select %280, %279, %249 : vector<16x128xi1>, vector<16x128xf32>
    %c8_i32 = arith.constant 8 : i32
    %282 = vector.broadcast %c8_i32 : i32 to vector<16x128xi32>
    %283 = arith.select %280, %282, %251 : vector<16x128xi1>, vector<16x128xi32>
    %284 = vector.shape_cast %255 : vector<16x1xf32> to vector<16x1xf32>
    %285 = vector.broadcast %284 : vector<16x1xf32> to vector<16x128xf32>
    %286 = arith.select %280, %285, %254 : vector<16x128xi1>, vector<16x128xf32>
    %287 = vector.extract_strided_slice %0 {offsets = [0, 9], sizes = [16, 1], strides = [1, 1]} : vector<16x16xf32> to vector<16x1xf32>
    %288 = vector.broadcast %287 : vector<16x1xf32> to vector<16x128xf32>
    %289 = arith.subf %2, %288 : vector<16x128xf32>
    %290 = arith.mulf %289, %289 : vector<16x128xf32>
    %291 = vector.extract_strided_slice %290 {offsets = [0, 0], sizes = [4, 128], strides = [1, 1]} : vector<16x128xf32> to vector<4x128xf32>
    %cst_39 = arith.constant dense<0.000000e+00> : vector<128xf32>
    %292 = vector.multi_reduction <add>, %291, %cst_39 [0] : vector<4x128xf32> to vector<128xf32>
    %293 = vector.shape_cast %292 : vector<128xf32> to vector<1x128xf32>
    %294 = vector.shape_cast %293 : vector<1x128xf32> to vector<1x128xf32>
    %295 = vector.broadcast %294 : vector<1x128xf32> to vector<4x128xf32>
    %296 = vector.extract_strided_slice %290 {offsets = [4, 0], sizes = [4, 128], strides = [1, 1]} : vector<16x128xf32> to vector<4x128xf32>
    %cst_40 = arith.constant dense<0.000000e+00> : vector<128xf32>
    %297 = vector.multi_reduction <add>, %296, %cst_40 [0] : vector<4x128xf32> to vector<128xf32>
    %298 = vector.shape_cast %297 : vector<128xf32> to vector<1x128xf32>
    %299 = vector.shape_cast %298 : vector<1x128xf32> to vector<1x128xf32>
    %300 = vector.broadcast %299 : vector<1x128xf32> to vector<4x128xf32>
    %301 = vector.extract_strided_slice %290 {offsets = [8, 0], sizes = [4, 128], strides = [1, 1]} : vector<16x128xf32> to vector<4x128xf32>
    %cst_41 = arith.constant dense<0.000000e+00> : vector<128xf32>
    %302 = vector.multi_reduction <add>, %301, %cst_41 [0] : vector<4x128xf32> to vector<128xf32>
    %303 = vector.shape_cast %302 : vector<128xf32> to vector<1x128xf32>
    %304 = vector.shape_cast %303 : vector<1x128xf32> to vector<1x128xf32>
    %305 = vector.broadcast %304 : vector<1x128xf32> to vector<4x128xf32>
    %306 = vector.extract_strided_slice %290 {offsets = [12, 0], sizes = [4, 128], strides = [1, 1]} : vector<16x128xf32> to vector<4x128xf32>
    %cst_42 = arith.constant dense<0.000000e+00> : vector<128xf32>
    %307 = vector.multi_reduction <add>, %306, %cst_42 [0] : vector<4x128xf32> to vector<128xf32>
    %308 = vector.shape_cast %307 : vector<128xf32> to vector<1x128xf32>
    %309 = vector.shape_cast %308 : vector<1x128xf32> to vector<1x128xf32>
    %310 = vector.broadcast %309 : vector<1x128xf32> to vector<4x128xf32>
    %311 = tpu.concatenate %295, %300, %305, %310 in 0 : vector<4x128xf32>, vector<4x128xf32>, vector<4x128xf32>, vector<4x128xf32> -> vector<16x128xf32>
    %312 = arith.cmpf olt, %311, %281 : vector<16x128xf32>
    %313 = arith.select %312, %311, %281 : vector<16x128xi1>, vector<16x128xf32>
    %c9_i32 = arith.constant 9 : i32
    %314 = vector.broadcast %c9_i32 : i32 to vector<16x128xi32>
    %315 = arith.select %312, %314, %283 : vector<16x128xi1>, vector<16x128xi32>
    %316 = vector.shape_cast %287 : vector<16x1xf32> to vector<16x1xf32>
    %317 = vector.broadcast %316 : vector<16x1xf32> to vector<16x128xf32>
    %318 = arith.select %312, %317, %286 : vector<16x128xi1>, vector<16x128xf32>
    %319 = vector.extract_strided_slice %0 {offsets = [0, 10], sizes = [16, 1], strides = [1, 1]} : vector<16x16xf32> to vector<16x1xf32>
    %320 = vector.broadcast %319 : vector<16x1xf32> to vector<16x128xf32>
    %321 = arith.subf %2, %320 : vector<16x128xf32>
    %322 = arith.mulf %321, %321 : vector<16x128xf32>
    %323 = vector.extract_strided_slice %322 {offsets = [0, 0], sizes = [4, 128], strides = [1, 1]} : vector<16x128xf32> to vector<4x128xf32>
    %cst_43 = arith.constant dense<0.000000e+00> : vector<128xf32>
    %324 = vector.multi_reduction <add>, %323, %cst_43 [0] : vector<4x128xf32> to vector<128xf32>
    %325 = vector.shape_cast %324 : vector<128xf32> to vector<1x128xf32>
    %326 = vector.shape_cast %325 : vector<1x128xf32> to vector<1x128xf32>
    %327 = vector.broadcast %326 : vector<1x128xf32> to vector<4x128xf32>
    %328 = vector.extract_strided_slice %322 {offsets = [4, 0], sizes = [4, 128], strides = [1, 1]} : vector<16x128xf32> to vector<4x128xf32>
    %cst_44 = arith.constant dense<0.000000e+00> : vector<128xf32>
    %329 = vector.multi_reduction <add>, %328, %cst_44 [0] : vector<4x128xf32> to vector<128xf32>
    %330 = vector.shape_cast %329 : vector<128xf32> to vector<1x128xf32>
    %331 = vector.shape_cast %330 : vector<1x128xf32> to vector<1x128xf32>
    %332 = vector.broadcast %331 : vector<1x128xf32> to vector<4x128xf32>
    %333 = vector.extract_strided_slice %322 {offsets = [8, 0], sizes = [4, 128], strides = [1, 1]} : vector<16x128xf32> to vector<4x128xf32>
    %cst_45 = arith.constant dense<0.000000e+00> : vector<128xf32>
    %334 = vector.multi_reduction <add>, %333, %cst_45 [0] : vector<4x128xf32> to vector<128xf32>
    %335 = vector.shape_cast %334 : vector<128xf32> to vector<1x128xf32>
    %336 = vector.shape_cast %335 : vector<1x128xf32> to vector<1x128xf32>
    %337 = vector.broadcast %336 : vector<1x128xf32> to vector<4x128xf32>
    %338 = vector.extract_strided_slice %322 {offsets = [12, 0], sizes = [4, 128], strides = [1, 1]} : vector<16x128xf32> to vector<4x128xf32>
    %cst_46 = arith.constant dense<0.000000e+00> : vector<128xf32>
    %339 = vector.multi_reduction <add>, %338, %cst_46 [0] : vector<4x128xf32> to vector<128xf32>
    %340 = vector.shape_cast %339 : vector<128xf32> to vector<1x128xf32>
    %341 = vector.shape_cast %340 : vector<1x128xf32> to vector<1x128xf32>
    %342 = vector.broadcast %341 : vector<1x128xf32> to vector<4x128xf32>
    %343 = tpu.concatenate %327, %332, %337, %342 in 0 : vector<4x128xf32>, vector<4x128xf32>, vector<4x128xf32>, vector<4x128xf32> -> vector<16x128xf32>
    %344 = arith.cmpf olt, %343, %313 : vector<16x128xf32>
    %345 = arith.select %344, %343, %313 : vector<16x128xi1>, vector<16x128xf32>
    %c10_i32 = arith.constant 10 : i32
    %346 = vector.broadcast %c10_i32 : i32 to vector<16x128xi32>
    %347 = arith.select %344, %346, %315 : vector<16x128xi1>, vector<16x128xi32>
    %348 = vector.shape_cast %319 : vector<16x1xf32> to vector<16x1xf32>
    %349 = vector.broadcast %348 : vector<16x1xf32> to vector<16x128xf32>
    %350 = arith.select %344, %349, %318 : vector<16x128xi1>, vector<16x128xf32>
    %351 = vector.extract_strided_slice %0 {offsets = [0, 11], sizes = [16, 1], strides = [1, 1]} : vector<16x16xf32> to vector<16x1xf32>
    %352 = vector.broadcast %351 : vector<16x1xf32> to vector<16x128xf32>
    %353 = arith.subf %2, %352 : vector<16x128xf32>
    %354 = arith.mulf %353, %353 : vector<16x128xf32>
    %355 = vector.extract_strided_slice %354 {offsets = [0, 0], sizes = [4, 128], strides = [1, 1]} : vector<16x128xf32> to vector<4x128xf32>
    %cst_47 = arith.constant dense<0.000000e+00> : vector<128xf32>
    %356 = vector.multi_reduction <add>, %355, %cst_47 [0] : vector<4x128xf32> to vector<128xf32>
    %357 = vector.shape_cast %356 : vector<128xf32> to vector<1x128xf32>
    %358 = vector.shape_cast %357 : vector<1x128xf32> to vector<1x128xf32>
    %359 = vector.broadcast %358 : vector<1x128xf32> to vector<4x128xf32>
    %360 = vector.extract_strided_slice %354 {offsets = [4, 0], sizes = [4, 128], strides = [1, 1]} : vector<16x128xf32> to vector<4x128xf32>
    %cst_48 = arith.constant dense<0.000000e+00> : vector<128xf32>
    %361 = vector.multi_reduction <add>, %360, %cst_48 [0] : vector<4x128xf32> to vector<128xf32>
    %362 = vector.shape_cast %361 : vector<128xf32> to vector<1x128xf32>
    %363 = vector.shape_cast %362 : vector<1x128xf32> to vector<1x128xf32>
    %364 = vector.broadcast %363 : vector<1x128xf32> to vector<4x128xf32>
    %365 = vector.extract_strided_slice %354 {offsets = [8, 0], sizes = [4, 128], strides = [1, 1]} : vector<16x128xf32> to vector<4x128xf32>
    %cst_49 = arith.constant dense<0.000000e+00> : vector<128xf32>
    %366 = vector.multi_reduction <add>, %365, %cst_49 [0] : vector<4x128xf32> to vector<128xf32>
    %367 = vector.shape_cast %366 : vector<128xf32> to vector<1x128xf32>
    %368 = vector.shape_cast %367 : vector<1x128xf32> to vector<1x128xf32>
    %369 = vector.broadcast %368 : vector<1x128xf32> to vector<4x128xf32>
    %370 = vector.extract_strided_slice %354 {offsets = [12, 0], sizes = [4, 128], strides = [1, 1]} : vector<16x128xf32> to vector<4x128xf32>
    %cst_50 = arith.constant dense<0.000000e+00> : vector<128xf32>
    %371 = vector.multi_reduction <add>, %370, %cst_50 [0] : vector<4x128xf32> to vector<128xf32>
    %372 = vector.shape_cast %371 : vector<128xf32> to vector<1x128xf32>
    %373 = vector.shape_cast %372 : vector<1x128xf32> to vector<1x128xf32>
    %374 = vector.broadcast %373 : vector<1x128xf32> to vector<4x128xf32>
    %375 = tpu.concatenate %359, %364, %369, %374 in 0 : vector<4x128xf32>, vector<4x128xf32>, vector<4x128xf32>, vector<4x128xf32> -> vector<16x128xf32>
    %376 = arith.cmpf olt, %375, %345 : vector<16x128xf32>
    %377 = arith.select %376, %375, %345 : vector<16x128xi1>, vector<16x128xf32>
    %c11_i32 = arith.constant 11 : i32
    %378 = vector.broadcast %c11_i32 : i32 to vector<16x128xi32>
    %379 = arith.select %376, %378, %347 : vector<16x128xi1>, vector<16x128xi32>
    %380 = vector.shape_cast %351 : vector<16x1xf32> to vector<16x1xf32>
    %381 = vector.broadcast %380 : vector<16x1xf32> to vector<16x128xf32>
    %382 = arith.select %376, %381, %350 : vector<16x128xi1>, vector<16x128xf32>
    %383 = vector.extract_strided_slice %0 {offsets = [0, 12], sizes = [16, 1], strides = [1, 1]} : vector<16x16xf32> to vector<16x1xf32>
    %384 = vector.broadcast %383 : vector<16x1xf32> to vector<16x128xf32>
    %385 = arith.subf %2, %384 : vector<16x128xf32>
    %386 = arith.mulf %385, %385 : vector<16x128xf32>
    %387 = vector.extract_strided_slice %386 {offsets = [0, 0], sizes = [4, 128], strides = [1, 1]} : vector<16x128xf32> to vector<4x128xf32>
    %cst_51 = arith.constant dense<0.000000e+00> : vector<128xf32>
    %388 = vector.multi_reduction <add>, %387, %cst_51 [0] : vector<4x128xf32> to vector<128xf32>
    %389 = vector.shape_cast %388 : vector<128xf32> to vector<1x128xf32>
    %390 = vector.shape_cast %389 : vector<1x128xf32> to vector<1x128xf32>
    %391 = vector.broadcast %390 : vector<1x128xf32> to vector<4x128xf32>
    %392 = vector.extract_strided_slice %386 {offsets = [4, 0], sizes = [4, 128], strides = [1, 1]} : vector<16x128xf32> to vector<4x128xf32>
    %cst_52 = arith.constant dense<0.000000e+00> : vector<128xf32>
    %393 = vector.multi_reduction <add>, %392, %cst_52 [0] : vector<4x128xf32> to vector<128xf32>
    %394 = vector.shape_cast %393 : vector<128xf32> to vector<1x128xf32>
    %395 = vector.shape_cast %394 : vector<1x128xf32> to vector<1x128xf32>
    %396 = vector.broadcast %395 : vector<1x128xf32> to vector<4x128xf32>
    %397 = vector.extract_strided_slice %386 {offsets = [8, 0], sizes = [4, 128], strides = [1, 1]} : vector<16x128xf32> to vector<4x128xf32>
    %cst_53 = arith.constant dense<0.000000e+00> : vector<128xf32>
    %398 = vector.multi_reduction <add>, %397, %cst_53 [0] : vector<4x128xf32> to vector<128xf32>
    %399 = vector.shape_cast %398 : vector<128xf32> to vector<1x128xf32>
    %400 = vector.shape_cast %399 : vector<1x128xf32> to vector<1x128xf32>
    %401 = vector.broadcast %400 : vector<1x128xf32> to vector<4x128xf32>
    %402 = vector.extract_strided_slice %386 {offsets = [12, 0], sizes = [4, 128], strides = [1, 1]} : vector<16x128xf32> to vector<4x128xf32>
    %cst_54 = arith.constant dense<0.000000e+00> : vector<128xf32>
    %403 = vector.multi_reduction <add>, %402, %cst_54 [0] : vector<4x128xf32> to vector<128xf32>
    %404 = vector.shape_cast %403 : vector<128xf32> to vector<1x128xf32>
    %405 = vector.shape_cast %404 : vector<1x128xf32> to vector<1x128xf32>
    %406 = vector.broadcast %405 : vector<1x128xf32> to vector<4x128xf32>
    %407 = tpu.concatenate %391, %396, %401, %406 in 0 : vector<4x128xf32>, vector<4x128xf32>, vector<4x128xf32>, vector<4x128xf32> -> vector<16x128xf32>
    %408 = arith.cmpf olt, %407, %377 : vector<16x128xf32>
    %409 = arith.select %408, %407, %377 : vector<16x128xi1>, vector<16x128xf32>
    %c12_i32 = arith.constant 12 : i32
    %410 = vector.broadcast %c12_i32 : i32 to vector<16x128xi32>
    %411 = arith.select %408, %410, %379 : vector<16x128xi1>, vector<16x128xi32>
    %412 = vector.shape_cast %383 : vector<16x1xf32> to vector<16x1xf32>
    %413 = vector.broadcast %412 : vector<16x1xf32> to vector<16x128xf32>
    %414 = arith.select %408, %413, %382 : vector<16x128xi1>, vector<16x128xf32>
    %415 = vector.extract_strided_slice %0 {offsets = [0, 13], sizes = [16, 1], strides = [1, 1]} : vector<16x16xf32> to vector<16x1xf32>
    %416 = vector.broadcast %415 : vector<16x1xf32> to vector<16x128xf32>
    %417 = arith.subf %2, %416 : vector<16x128xf32>
    %418 = arith.mulf %417, %417 : vector<16x128xf32>
    %419 = vector.extract_strided_slice %418 {offsets = [0, 0], sizes = [4, 128], strides = [1, 1]} : vector<16x128xf32> to vector<4x128xf32>
    %cst_55 = arith.constant dense<0.000000e+00> : vector<128xf32>
    %420 = vector.multi_reduction <add>, %419, %cst_55 [0] : vector<4x128xf32> to vector<128xf32>
    %421 = vector.shape_cast %420 : vector<128xf32> to vector<1x128xf32>
    %422 = vector.shape_cast %421 : vector<1x128xf32> to vector<1x128xf32>
    %423 = vector.broadcast %422 : vector<1x128xf32> to vector<4x128xf32>
    %424 = vector.extract_strided_slice %418 {offsets = [4, 0], sizes = [4, 128], strides = [1, 1]} : vector<16x128xf32> to vector<4x128xf32>
    %cst_56 = arith.constant dense<0.000000e+00> : vector<128xf32>
    %425 = vector.multi_reduction <add>, %424, %cst_56 [0] : vector<4x128xf32> to vector<128xf32>
    %426 = vector.shape_cast %425 : vector<128xf32> to vector<1x128xf32>
    %427 = vector.shape_cast %426 : vector<1x128xf32> to vector<1x128xf32>
    %428 = vector.broadcast %427 : vector<1x128xf32> to vector<4x128xf32>
    %429 = vector.extract_strided_slice %418 {offsets = [8, 0], sizes = [4, 128], strides = [1, 1]} : vector<16x128xf32> to vector<4x128xf32>
    %cst_57 = arith.constant dense<0.000000e+00> : vector<128xf32>
    %430 = vector.multi_reduction <add>, %429, %cst_57 [0] : vector<4x128xf32> to vector<128xf32>
    %431 = vector.shape_cast %430 : vector<128xf32> to vector<1x128xf32>
    %432 = vector.shape_cast %431 : vector<1x128xf32> to vector<1x128xf32>
    %433 = vector.broadcast %432 : vector<1x128xf32> to vector<4x128xf32>
    %434 = vector.extract_strided_slice %418 {offsets = [12, 0], sizes = [4, 128], strides = [1, 1]} : vector<16x128xf32> to vector<4x128xf32>
    %cst_58 = arith.constant dense<0.000000e+00> : vector<128xf32>
    %435 = vector.multi_reduction <add>, %434, %cst_58 [0] : vector<4x128xf32> to vector<128xf32>
    %436 = vector.shape_cast %435 : vector<128xf32> to vector<1x128xf32>
    %437 = vector.shape_cast %436 : vector<1x128xf32> to vector<1x128xf32>
    %438 = vector.broadcast %437 : vector<1x128xf32> to vector<4x128xf32>
    %439 = tpu.concatenate %423, %428, %433, %438 in 0 : vector<4x128xf32>, vector<4x128xf32>, vector<4x128xf32>, vector<4x128xf32> -> vector<16x128xf32>
    %440 = arith.cmpf olt, %439, %409 : vector<16x128xf32>
    %441 = arith.select %440, %439, %409 : vector<16x128xi1>, vector<16x128xf32>
    %c13_i32 = arith.constant 13 : i32
    %442 = vector.broadcast %c13_i32 : i32 to vector<16x128xi32>
    %443 = arith.select %440, %442, %411 : vector<16x128xi1>, vector<16x128xi32>
    %444 = vector.shape_cast %415 : vector<16x1xf32> to vector<16x1xf32>
    %445 = vector.broadcast %444 : vector<16x1xf32> to vector<16x128xf32>
    %446 = arith.select %440, %445, %414 : vector<16x128xi1>, vector<16x128xf32>
    %447 = vector.extract_strided_slice %0 {offsets = [0, 14], sizes = [16, 1], strides = [1, 1]} : vector<16x16xf32> to vector<16x1xf32>
    %448 = vector.broadcast %447 : vector<16x1xf32> to vector<16x128xf32>
    %449 = arith.subf %2, %448 : vector<16x128xf32>
    %450 = arith.mulf %449, %449 : vector<16x128xf32>
    %451 = vector.extract_strided_slice %450 {offsets = [0, 0], sizes = [4, 128], strides = [1, 1]} : vector<16x128xf32> to vector<4x128xf32>
    %cst_59 = arith.constant dense<0.000000e+00> : vector<128xf32>
    %452 = vector.multi_reduction <add>, %451, %cst_59 [0] : vector<4x128xf32> to vector<128xf32>
    %453 = vector.shape_cast %452 : vector<128xf32> to vector<1x128xf32>
    %454 = vector.shape_cast %453 : vector<1x128xf32> to vector<1x128xf32>
    %455 = vector.broadcast %454 : vector<1x128xf32> to vector<4x128xf32>
    %456 = vector.extract_strided_slice %450 {offsets = [4, 0], sizes = [4, 128], strides = [1, 1]} : vector<16x128xf32> to vector<4x128xf32>
    %cst_60 = arith.constant dense<0.000000e+00> : vector<128xf32>
    %457 = vector.multi_reduction <add>, %456, %cst_60 [0] : vector<4x128xf32> to vector<128xf32>
    %458 = vector.shape_cast %457 : vector<128xf32> to vector<1x128xf32>
    %459 = vector.shape_cast %458 : vector<1x128xf32> to vector<1x128xf32>
    %460 = vector.broadcast %459 : vector<1x128xf32> to vector<4x128xf32>
    %461 = vector.extract_strided_slice %450 {offsets = [8, 0], sizes = [4, 128], strides = [1, 1]} : vector<16x128xf32> to vector<4x128xf32>
    %cst_61 = arith.constant dense<0.000000e+00> : vector<128xf32>
    %462 = vector.multi_reduction <add>, %461, %cst_61 [0] : vector<4x128xf32> to vector<128xf32>
    %463 = vector.shape_cast %462 : vector<128xf32> to vector<1x128xf32>
    %464 = vector.shape_cast %463 : vector<1x128xf32> to vector<1x128xf32>
    %465 = vector.broadcast %464 : vector<1x128xf32> to vector<4x128xf32>
    %466 = vector.extract_strided_slice %450 {offsets = [12, 0], sizes = [4, 128], strides = [1, 1]} : vector<16x128xf32> to vector<4x128xf32>
    %cst_62 = arith.constant dense<0.000000e+00> : vector<128xf32>
    %467 = vector.multi_reduction <add>, %466, %cst_62 [0] : vector<4x128xf32> to vector<128xf32>
    %468 = vector.shape_cast %467 : vector<128xf32> to vector<1x128xf32>
    %469 = vector.shape_cast %468 : vector<1x128xf32> to vector<1x128xf32>
    %470 = vector.broadcast %469 : vector<1x128xf32> to vector<4x128xf32>
    %471 = tpu.concatenate %455, %460, %465, %470 in 0 : vector<4x128xf32>, vector<4x128xf32>, vector<4x128xf32>, vector<4x128xf32> -> vector<16x128xf32>
    %472 = arith.cmpf olt, %471, %441 : vector<16x128xf32>
    %473 = arith.select %472, %471, %441 : vector<16x128xi1>, vector<16x128xf32>
    %c14_i32 = arith.constant 14 : i32
    %474 = vector.broadcast %c14_i32 : i32 to vector<16x128xi32>
    %475 = arith.select %472, %474, %443 : vector<16x128xi1>, vector<16x128xi32>
    %476 = vector.shape_cast %447 : vector<16x1xf32> to vector<16x1xf32>
    %477 = vector.broadcast %476 : vector<16x1xf32> to vector<16x128xf32>
    %478 = arith.select %472, %477, %446 : vector<16x128xi1>, vector<16x128xf32>
    %479 = vector.extract_strided_slice %0 {offsets = [0, 15], sizes = [16, 1], strides = [1, 1]} : vector<16x16xf32> to vector<16x1xf32>
    %480 = vector.broadcast %479 : vector<16x1xf32> to vector<16x128xf32>
    %481 = arith.subf %2, %480 : vector<16x128xf32>
    %482 = arith.mulf %481, %481 : vector<16x128xf32>
    %483 = vector.extract_strided_slice %482 {offsets = [0, 0], sizes = [4, 128], strides = [1, 1]} : vector<16x128xf32> to vector<4x128xf32>
    %cst_63 = arith.constant dense<0.000000e+00> : vector<128xf32>
    %484 = vector.multi_reduction <add>, %483, %cst_63 [0] : vector<4x128xf32> to vector<128xf32>
    %485 = vector.shape_cast %484 : vector<128xf32> to vector<1x128xf32>
    %486 = vector.shape_cast %485 : vector<1x128xf32> to vector<1x128xf32>
    %487 = vector.broadcast %486 : vector<1x128xf32> to vector<4x128xf32>
    %488 = vector.extract_strided_slice %482 {offsets = [4, 0], sizes = [4, 128], strides = [1, 1]} : vector<16x128xf32> to vector<4x128xf32>
    %cst_64 = arith.constant dense<0.000000e+00> : vector<128xf32>
    %489 = vector.multi_reduction <add>, %488, %cst_64 [0] : vector<4x128xf32> to vector<128xf32>
    %490 = vector.shape_cast %489 : vector<128xf32> to vector<1x128xf32>
    %491 = vector.shape_cast %490 : vector<1x128xf32> to vector<1x128xf32>
    %492 = vector.broadcast %491 : vector<1x128xf32> to vector<4x128xf32>
    %493 = vector.extract_strided_slice %482 {offsets = [8, 0], sizes = [4, 128], strides = [1, 1]} : vector<16x128xf32> to vector<4x128xf32>
    %cst_65 = arith.constant dense<0.000000e+00> : vector<128xf32>
    %494 = vector.multi_reduction <add>, %493, %cst_65 [0] : vector<4x128xf32> to vector<128xf32>
    %495 = vector.shape_cast %494 : vector<128xf32> to vector<1x128xf32>
    %496 = vector.shape_cast %495 : vector<1x128xf32> to vector<1x128xf32>
    %497 = vector.broadcast %496 : vector<1x128xf32> to vector<4x128xf32>
    %498 = vector.extract_strided_slice %482 {offsets = [12, 0], sizes = [4, 128], strides = [1, 1]} : vector<16x128xf32> to vector<4x128xf32>
    %cst_66 = arith.constant dense<0.000000e+00> : vector<128xf32>
    %499 = vector.multi_reduction <add>, %498, %cst_66 [0] : vector<4x128xf32> to vector<128xf32>
    %500 = vector.shape_cast %499 : vector<128xf32> to vector<1x128xf32>
    %501 = vector.shape_cast %500 : vector<1x128xf32> to vector<1x128xf32>
    %502 = vector.broadcast %501 : vector<1x128xf32> to vector<4x128xf32>
    %503 = tpu.concatenate %487, %492, %497, %502 in 0 : vector<4x128xf32>, vector<4x128xf32>, vector<4x128xf32>, vector<4x128xf32> -> vector<16x128xf32>
    %504 = arith.cmpf olt, %503, %473 : vector<16x128xf32>
    %c15_i32 = arith.constant 15 : i32
    %505 = vector.broadcast %c15_i32 : i32 to vector<16x128xi32>
    %506 = arith.select %504, %505, %475 : vector<16x128xi1>, vector<16x128xi32>
    %507 = vector.shape_cast %479 : vector<16x1xf32> to vector<16x1xf32>
    %508 = vector.broadcast %507 : vector<16x1xf32> to vector<16x128xf32>
    %509 = arith.select %504, %508, %478 : vector<16x128xi1>, vector<16x128xf32>
    %c0_67 = arith.constant 0 : index
    %c0_68 = arith.constant 0 : index
    %c0_69 = arith.constant 0 : index
    %510 = vector.load %arg4[%c0_67, %c0_68, %c0_69] : memref<1x16x128xf32, #tpu.memory_space<vmem>>, vector<1x16x128xf32>
    %511 = vector.shape_cast %510 : vector<1x16x128xf32> to vector<16x128xf32>
    %512 = vector.shape_cast %509 : vector<16x128xf32> to vector<1x16x128xf32>
    tpu.vector_store %arg4[%c0_67, %c0_68, %c0_69], %512 {strides = array<i32>} : memref<1x16x128xf32, #tpu.memory_space<vmem>>, vector<1x16x128xf32>,
    %513 = vector.extract_strided_slice %506 {offsets = [0, 0], sizes = [1, 128], strides = [1, 1]} : vector<16x128xi32> to vector<1x128xi32>
    %c0_70 = arith.constant 0 : index
    %c0_71 = arith.constant 0 : index
    %c0_72 = arith.constant 0 : index
    %514 = vector.load %arg5[%c0_70, %c0_71, %c0_72] : memref<1x4x128xi32, #tpu.memory_space<vmem>>, vector<1x1x128xi32>
    %515 = vector.shape_cast %514 : vector<1x1x128xi32> to vector<1x128xi32>
    %516 = vector.shape_cast %513 : vector<1x128xi32> to vector<1x1x128xi32>
    tpu.vector_store %arg5[%c0_70, %c0_71, %c0_72], %516 {strides = array<i32>} : memref<1x4x128xi32, #tpu.memory_space<vmem>>, vector<1x1x128xi32>,
    %517 = vector.extract_strided_slice %506 {offsets = [4, 0], sizes = [1, 128], strides = [1, 1]} : vector<16x128xi32> to vector<1x128xi32>
    %c0_73 = arith.constant 0 : index
    %c1 = arith.constant 1 : index
    %c0_74 = arith.constant 0 : index
    %518 = vector.load %arg5[%c0_73, %c1, %c0_74] : memref<1x4x128xi32, #tpu.memory_space<vmem>>, vector<1x1x128xi32>
    %519 = vector.shape_cast %518 : vector<1x1x128xi32> to vector<1x128xi32>
    %520 = vector.shape_cast %517 : vector<1x128xi32> to vector<1x1x128xi32>
    tpu.vector_store %arg5[%c0_73, %c1, %c0_74], %520 {strides = array<i32>} : memref<1x4x128xi32, #tpu.memory_space<vmem>>, vector<1x1x128xi32>,
    %521 = vector.extract_strided_slice %506 {offsets = [8, 0], sizes = [1, 128], strides = [1, 1]} : vector<16x128xi32> to vector<1x128xi32>
    %c0_75 = arith.constant 0 : index
    %c2 = arith.constant 2 : index
    %c0_76 = arith.constant 0 : index
    %522 = vector.load %arg5[%c0_75, %c2, %c0_76] : memref<1x4x128xi32, #tpu.memory_space<vmem>>, vector<1x1x128xi32>
    %523 = vector.shape_cast %522 : vector<1x1x128xi32> to vector<1x128xi32>
    %524 = vector.shape_cast %521 : vector<1x128xi32> to vector<1x1x128xi32>
    tpu.vector_store %arg5[%c0_75, %c2, %c0_76], %524 {strides = array<i32>} : memref<1x4x128xi32, #tpu.memory_space<vmem>>, vector<1x1x128xi32>,
    %525 = vector.extract_strided_slice %506 {offsets = [12, 0], sizes = [1, 128], strides = [1, 1]} : vector<16x128xi32> to vector<1x128xi32>
    %c0_77 = arith.constant 0 : index
    %c3 = arith.constant 3 : index
    %c0_78 = arith.constant 0 : index
    %526 = vector.load %arg5[%c0_77, %c3, %c0_78] : memref<1x4x128xi32, #tpu.memory_space<vmem>>, vector<1x1x128xi32>
    %527 = vector.shape_cast %526 : vector<1x1x128xi32> to vector<1x128xi32>
    %528 = vector.shape_cast %525 : vector<1x128xi32> to vector<1x1x128xi32>
    tpu.vector_store %arg5[%c0_77, %c3, %c0_78], %528 {strides = array<i32>} : memref<1x4x128xi32, #tpu.memory_space<vmem>>, vector<1x1x128xi32>,
    return
  }
  func.func @transform_0(%arg0: i32, %arg1: i32) -> (i32, i32, i32) {
    %c0_i32 = arith.constant 0 : i32
    %c0_i32_0 = arith.constant 0 : i32
    return %arg0, %c0_i32, %arg1 : i32, i32, i32
  }
  func.func @transform_1(%arg0: i32, %arg1: i32) -> (i32, i32) {
    %c0_i32 = arith.constant 0 : i32
    %c0_i32_0 = arith.constant 0 : i32
    %c0_i32_1 = arith.constant 0 : i32
    return %c0_i32, %c0_i32_0 : i32, i32
  }
  func.func @transform_2(%arg0: i32, %arg1: i32) -> (i32, i32, i32) {
    %c0_i32 = arith.constant 0 : i32
    %c0_i32_0 = arith.constant 0 : i32
    return %arg0, %c0_i32, %arg1 : i32, i32, i32
  }
  func.func @transform_3(%arg0: i32, %arg1: i32) -> (i32, i32, i32) {
    %c0_i32 = arith.constant 0 : i32
    %c0_i32_0 = arith.constant 0 : i32
    return %arg0, %c0_i32, %arg1 : i32, i32, i32
  }
}

</mosaic_0001>

<llo_original>
// kernel: tpu_custom_call.1
$region0: #{tpu_custom_call.1}
  #allocation0 [shape = 'u32[]', space=smem, size = 0x4, offset = 0x4, fixed_abs, tag = 'smem constant byte address 0x4 - core index']
  #allocation1 [shape = 'u32[144,128]{1,0:T(1,128)}', space=vmem, size = 0x12000, scoped, tag = 'internal scratch']
  %s0 = inlined_call_operand.hbm [shape: f32[2,16,128], index: 0, kind: input, shape index: {}]
  %s1 = inlined_call_operand.hbm [shape: f32[16,16], index: 1, kind: input, shape index: {}]
  %s2 = inlined_call_operand.hbm [shape: f32[2,16,128], index: 2, kind: output, shape index: {0}]
  %s3 = inlined_call_operand.hbm [shape: s32[2,4,128], index: 3, kind: output, shape index: {1}]
  %4 = xla_tuple %s2, %s3
  %s5 = sld [smem:[#allocation0]]
  $region57: #{tpu_custom_call.1} parent=0
    _
  %s7 = ssub.s32 1, %s5
  %s8 = scalar_select 0, %s7, %s5
  $region1: #{tpu_custom_call.1} parent=0
    #allocation2 [shape = 'u8[16384]{0}', space=vmem, size = 0x4000, scoped, tag = 'input window, operand 0']
    #allocation3 [shape = 's32[2]{0}', space=sflag, size = 0x8, scoped, tag = 'scoped memory for tpu_custom_call.1']
    #allocation4 [shape = 's32[2]{0}', space=sflag, size = 0x8, scoped, tag = 'scoped memory for tpu_custom_call.1']
    #allocation5 [shape = 'u8[8192]{0}', space=vmem, size = 0x2000, scoped, tag = 'input window, operand 1, single buffered']
    #allocation6 [shape = 's32[1]{0}', space=sflag, size = 0x4, scoped, tag = 'scoped memory for tpu_custom_call.1']
    #allocation7 [shape = 'u8[16384]{0}', space=vmem, size = 0x4000, scoped, tag = 'output window, operand 0']
    #allocation8 [shape = 'u8[4096]{0}', space=vmem, size = 0x1000, scoped, tag = 'output window, operand 1']
    #allocation9 [shape = 's32[2]{0}', space=sflag, size = 0x8, scoped, tag = 'scoped memory for tpu_custom_call.1']
    %9 = vsyncpa [#allocation3], 0
    %s10 = scalar_lea.sflag [#allocation3], 1
    %11 = vsyncpa %s10, 0
    %12 = vsyncpa [#allocation6], 0
    %13 = vsyncpa [#allocation4], 0
    %s14 = scalar_lea.sflag [#allocation4], 1
    %15 = vsyncpa %s14, 0
    %16 = vsyncpa [#allocation9], 0
    %s17 = scalar_lea.sflag [#allocation9], 1
    %18 = vsyncpa %s17, 0
    loop: start=0, step=1, limit=4
    $region2: #{tpu_custom_call.1} parent=1 // loop_pre_header
      _
    $region3: #{tpu_custom_call.1} parent=1 // loop_header
      %s20 = sphi 0, %s24
      %p21 = scmp.ge.s32.totalorder %s20, 4
      %s27 = sphi 0, %s39
      %s28 = sphi 0, %s35
      %s29 = sphi 0, %s27
      %s30 = sphi 0, %s28
      %s31 = sphi 0, %s29
      %s32 = sphi 0, %s30
      %s44 = sphi 0, %s46
      %s47 = sphi 0, %s44
      %s48 = sphi 0, %s47
      %s64 = sphi 0, %s48
      %s68 = sphi 0, %s68
      %s70 = sphi 0, %s68
      %s71 = sphi 0, %s70
      %s85 = sphi 0, %s71
      %s93 = sphi 0, %s95
      %s96 = sphi 0, %s93
      %s97 = sphi 0, %s96
      %s113 = sphi 0, %s97
      %s121 = sphi 0, %s123
      %s124 = sphi 0, %s121
      %s125 = sphi 0, %s124
      %s141 = sphi 0, %s125
    $region4: #{tpu_custom_call.1} parent=1 // loop_header_branch
      %23 = sbr.rel (%p21) target = $region8
    $region5: #{tpu_custom_call.1} parent=1 // loop_body
      %s25 = ssub.s32 %s20, 1
      %s26 = ssub.s32 %s20, 2
      %s33 = sadd.s32 1, %s28
      %p34 = scmp.ge.s32.totalorder %s33, 1
      %s35 = scalar_select %p34, 0, %s33
      %s36 = sadd.s32 1, %s27
      %s37 = scalar_select %p34, %s36, %s27
      %p38 = scmp.ge.s32.totalorder %s37, 2
      %s39 = scalar_select %p38, 0, %s37
      %s40 = ssub.s32 %s27, %s39
      %s41 = ssub.s32 %s28, %s35
      %s42 = sor.u32 %s40, %s41
      %p43 = scmp.eq.s32.totalorder %s42, 0
      %s45 = sadd.s32 %s44, 1
      %s46 = scalar_select %p43, %s44, %s45
      %p49 = pneg %p43
      %p50 = scmp.eq.s32.totalorder %s20, 1
      %p51 = por %p49, %p50
      %p52 = scmp.ne.s32.totalorder %s44, %s47
      %p53 = scmp.eq.s32.totalorder %s20, 0
      %p54 = por %p52, %p53
      %p55 = scmp.ne.s32.totalorder %s44, %s47
      %p56 = scmp.eq.s32.totalorder %s25, 1
      %p57 = por %p55, %p56
      %p58 = scmp.ne.s32.totalorder %s47, %s48
      %p59 = scmp.eq.s32.totalorder %s25, 0
      %p60 = por %p58, %p59
      %p61 = scmp.ne.s32.totalorder %s47, %s48
      %p62 = scmp.eq.s32.totalorder %s26, 1
      %p63 = por %p61, %p62
      %p65 = scmp.ne.s32.totalorder %s48, %s64
      %p66 = scmp.eq.s32.totalorder %s26, 0
      %p67 = por %p65, %p66
      %s69 = sadd.s32 %s68, 1
      %p72 = scmp.eq.s32.totalorder %s20, 1
      %p73 = scmp.ne.s32.totalorder %s68, %s70
      %p74 = scmp.eq.s32.totalorder %s20, 0
      %p75 = por %p73, %p74
      %p76 = scmp.ne.s32.totalorder %s68, %s70
      %p77 = scmp.eq.s32.totalorder %s25, 1
      %p78 = por %p76, %p77
      %p79 = scmp.ne.s32.totalorder %s70, %s71
      %p80 = scmp.eq.s32.totalorder %s25, 0
      %p81 = por %p79, %p80
      %p82 = scmp.ne.s32.totalorder %s70, %s71
      %p83 = scmp.eq.s32.totalorder %s26, 1
      %p84 = por %p82, %p83
      %p86 = scmp.ne.s32.totalorder %s71, %s85
      %p87 = scmp.eq.s32.totalorder %s26, 0
      %p88 = por %p86, %p87
      %s89 = ssub.s32 %s27, %s39
      %s90 = ssub.s32 %s28, %s35
      %s91 = sor.u32 %s89, %s90
      %p92 = scmp.eq.s32.totalorder %s91, 0
      %s94 = sadd.s32 %s93, 1
      %s95 = scalar_select %p92, %s93, %s94
      %p98 = pneg %p92
      %p99 = scmp.eq.s32.totalorder %s20, 1
      %p100 = por %p98, %p99
      %p101 = scmp.ne.s32.totalorder %s93, %s96
      %p102 = scmp.eq.s32.totalorder %s20, 0
      %p103 = por %p101, %p102
      %p104 = scmp.ne.s32.totalorder %s93, %s96
      %p105 = scmp.eq.s32.totalorder %s25, 1
      %p106 = por %p104, %p105
      %p107 = scmp.ne.s32.totalorder %s96, %s97
      %p108 = scmp.eq.s32.totalorder %s25, 0
      %p109 = por %p107, %p108
      %p110 = scmp.ne.s32.totalorder %s96, %s97
      %p111 = scmp.eq.s32.totalorder %s26, 1
      %p112 = por %p110, %p111
      %p114 = scmp.ne.s32.totalorder %s97, %s113
      %p115 = scmp.eq.s32.totalorder %s26, 0
      %p116 = por %p114, %p115
      %s117 = ssub.s32 %s27, %s39
      %s118 = ssub.s32 %s28, %s35
      %s119 = sor.u32 %s117, %s118
      %p120 = scmp.eq.s32.totalorder %s119, 0
      %s122 = sadd.s32 %s121, 1
      %s123 = scalar_select %p120, %s121, %s122
      %p126 = pneg %p120
      %p127 = scmp.eq.s32.totalorder %s20, 1
      %p128 = por %p126, %p127
      %p129 = scmp.ne.s32.totalorder %s121, %s124
      %p130 = scmp.eq.s32.totalorder %s20, 0
      %p131 = por %p129, %p130
      %p132 = scmp.ne.s32.totalorder %s121, %s124
      %p133 = scmp.eq.s32.totalorder %s25, 1
      %p134 = por %p132, %p133
      %p135 = scmp.ne.s32.totalorder %s124, %s125
      %p136 = scmp.eq.s32.totalorder %s25, 0
      %p137 = por %p135, %p136
      %p138 = scmp.ne.s32.totalorder %s124, %s125
      %p139 = scmp.eq.s32.totalorder %s26, 1
      %p140 = por %p138, %p139
      %p142 = scmp.ne.s32.totalorder %s125, %s141
      %p143 = scmp.eq.s32.totalorder %s26, 0
      %p144 = por %p142, %p143
      %p145 = scmp.le.s32.totalorder 1, %s20
      %p146 = scmp.lt.s32.totalorder %s20, 3
      %p147 = pnand %p145, %p146
      %p148 = pneg %p147
      // Predicated region
      $region9: #{tpu_custom_call.1} parent=5 // pred_check
        _
      $region10: #{tpu_custom_call.1} parent=5 // pred_check_branch
        %150 = sbr.rel (%p147) target = $region12
      $region11: #{tpu_custom_call.1} parent=5 // pred_region
        %s151 = ssub.s32 %s20, 1
        // Predicated region
        $region13: #{tpu_custom_call.1} parent=11 // pred_check
          %p152 = pneg %p81
        $region14: #{tpu_custom_call.1} parent=11 // pred_check_branch
          %154 = sbr.rel (%p152) target = $region16
        $region15: #{tpu_custom_call.1} parent=11 // pred_region
          %s156 = ssub.s32 256, 256
          %157 = vsyncadd [#allocation6], %s156
          %s158 = sshll.u32 [#allocation5], 4
          %s159 = int_to_ptr.vmem [resolvable:$true] %s158
          %164 = dma.hbm_to_vmem [thread:$0]  %s1, 256, %s159, [#allocation6], 128, 128, 8
        $region16: #{tpu_custom_call.1} parent=11 // pred_fallthru
          _
      $region12: #{tpu_custom_call.1} parent=5 // pred_fallthru
        _
      %p165 = scmp.lt.s32.totalorder %s20, 2
      // Predicated region
      $region17: #{tpu_custom_call.1} parent=5 // pred_check
        %p166 = pneg %p165
      $region18: #{tpu_custom_call.1} parent=5 // pred_check_branch
        %168 = sbr.rel (%p166) target = $region20
      $region19: #{tpu_custom_call.1} parent=5 // pred_region
        // Predicated region
        $region21: #{tpu_custom_call.1} parent=19 // pred_check
          %p169 = pneg %p54
        $region22: #{tpu_custom_call.1} parent=19 // pred_check_branch
          %171 = sbr.rel (%p169) target = $region24
        $region23: #{tpu_custom_call.1} parent=19 // pred_region
          %s172 = sand.u32 %s44, 1
          %s173 = scalar_lea.sflag [#allocation3], %s172
          %s174 = sand.u32 %s44, 1
          %s175 = smul.addr %s174, 16
          %s176 = scalar_lea.vmem [#allocation2], %s175
          %s178 = ssub.s32 256, 256
          %179 = vsyncadd %s173, %s178
          %s180 = smul.addr %s27, 2
          %s181 = sadd.s32 %s28, %s180
          %s182 = smul.addr %s181, 128
          %s183 = scalar_lea.hbm %s0, %s182
          %s184 = sshll.u32 %s176, 4
          %s185 = int_to_ptr.vmem [resolvable:$true] %s184
          %190 = dma.hbm_to_vmem [thread:$0]  %s183, 256, %s185, %s173, 128, 128, 8
        $region24: #{tpu_custom_call.1} parent=19 // pred_fallthru
          _
      $region20: #{tpu_custom_call.1} parent=5 // pred_fallthru
        _
      %p191 = scmp.le.s32.totalorder 1, %s20
      %p192 = scmp.lt.s32.totalorder %s20, 3
      %p193 = pnand %p191, %p192
      %p194 = pneg %p193
      // Predicated region
      $region25: #{tpu_custom_call.1} parent=5 // pred_check
        _
      $region26: #{tpu_custom_call.1} parent=5 // pred_check_branch
        %196 = sbr.rel (%p193) target = $region28
      $region27: #{tpu_custom_call.1} parent=5 // pred_region
        %s197 = ssub.s32 %s20, 1
        %s198 = sand.u32 %s47, 1
        %s199 = scalar_lea.sflag [#allocation3], %s198
        %s200 = sand.u32 %s47, 1
        %s201 = smul.addr %s200, 16
        %s202 = scalar_lea.vmem [#allocation2], %s201
        // Predicated region
        $region29: #{tpu_custom_call.1} parent=27 // pred_check
          %p203 = pneg %p60
        $region30: #{tpu_custom_call.1} parent=27 // pred_check_branch
          %205 = sbr.rel (%p203) target = $region32
        $region31: #{tpu_custom_call.1} parent=27 // pred_region
          %206 = dma.done %s199, 256
        $region32: #{tpu_custom_call.1} parent=27 // pred_fallthru
          _
        // Predicated region
        $region33: #{tpu_custom_call.1} parent=27 // pred_check
          %p207 = pneg %p81
        $region34: #{tpu_custom_call.1} parent=27 // pred_check_branch
          %209 = sbr.rel (%p207) target = $region36
        $region35: #{tpu_custom_call.1} parent=27 // pred_region
          %210 = dma.done [#allocation6], 256
        $region36: #{tpu_custom_call.1} parent=27 // pred_fallthru
          _
        %s211 = sand.u32 %s47, 1
        %s212 = scalar_lea.sflag [#allocation3], %s211
        %s213 = sand.u32 %s47, 1
        %s214 = smul.addr %s213, 16
        %s215 = scalar_lea.vmem [#allocation2], %s214
        %p216 = pneg %p60
        %p217 = pneg %p57
        %p218 = pneg %p81
        %p219 = pneg %p78
        %p220 = pneg %p109
        %p221 = pneg %p106
        %s222 = sand.u32 %s96, 1
        %s223 = scalar_lea.sflag [#allocation4], %s222
        %s224 = sand.u32 %s96, 1
        %s225 = smul.addr %s224, 16
        %s226 = scalar_lea.vmem [#allocation7], %s225
        %p227 = pneg %p137
        %p228 = pneg %p134
        %s229 = sand.u32 %s124, 1
        %s230 = scalar_lea.sflag [#allocation9], %s229
        %s231 = sand.u32 %s124, 1
        %s232 = smul.addr %s231, 4
        %s233 = scalar_lea.vmem [#allocation8], %s232
        %v234 = vld [vmem:[#allocation5] sm:$0xff]
        %v235 = vld [vmem:[#allocation5 + $0x8] sm:$0xff]
        %v236 = vld [vmem:[%s202] sm:$0xff]
        %v237 = vld [vmem:[%s202 + $0x8] sm:$0xff]
        %239 = vset.pattern.permute.xlu0 0
        %240 = vperm.xlu0 %239, %v234
        %v241 = vpop.permute.xlu0 %240
        %244 = vset.pattern.permute.xlu0 0
        %245 = vperm.xlu0 %244, %v235
        %v246 = vpop.permute.xlu0 %245
        %v248 = vsub.f32 %v236, %v241
        %v249 = vsub.f32 %v237, %v246
        %v250 = vmul.f32 %v248, %v248
        %v251 = vmul.f32 %v249, %v249
        %vm252 = vcmask 1043456
        %v253 = vsel %vm252, %v250, 0.0
        %v254 = vrot.slane %v253, 4
        %v255 = vadd.f32 %v253, %v254
        %v256 = vrot.slane %v255, 2
        %v257 = vadd.f32 %v255, %v256
        %v258 = vrot.slane %v257, 1
        %v259 = vadd.f32 %v257, %v258
        %v261 = vrot.slane %v250, 4
        %v263 = vsel %vm252, %v261, 0.0
        %v264 = vrot.slane %v263, 4
        %v265 = vadd.f32 %v263, %v264
        %v266 = vrot.slane %v265, 2
        %v267 = vadd.f32 %v265, %v266
        %v268 = vrot.slane %v267, 1
        %v269 = vadd.f32 %v267, %v268
        %v270 = vsel %vm252, %v251, 0.0
        %v271 = vrot.slane %v270, 4
        %v272 = vadd.f32 %v270, %v271
        %v273 = vrot.slane %v272, 2
        %v274 = vadd.f32 %v272, %v273
        %v275 = vrot.slane %v274, 1
        %v276 = vadd.f32 %v274, %v275
        %v278 = vrot.slane %v251, 4
        %v280 = vsel %vm252, %v278, 0.0
        %v281 = vrot.slane %v280, 4
        %v282 = vadd.f32 %v280, %v281
        %v283 = vrot.slane %v282, 2
        %v284 = vadd.f32 %v282, %v283
        %v285 = vrot.slane %v284, 1
        %v286 = vadd.f32 %v284, %v285
        %v287 = vsel %vm252, %v259, %v269
        %v288 = vsel %vm252, %v276, %v286
        %289 = vset.pattern.permute.xlu0 1
        %290 = vperm.xlu0 %289, %v234
        %v291 = vpop.permute.xlu0 %290
        %293 = vset.pattern.permute.xlu0 1
        %294 = vperm.xlu0 %293, %v235
        %v295 = vpop.permute.xlu0 %294
        %v297 = vsub.f32 %v236, %v291
        %v298 = vsub.f32 %v237, %v295
        %v299 = vmul.f32 %v297, %v297
        %v300 = vmul.f32 %v298, %v298
        %v301 = vsel %vm252, %v299, 0.0
        %v302 = vrot.slane %v301, 4
        %v303 = vadd.f32 %v301, %v302
        %v304 = vrot.slane %v303, 2
        %v305 = vadd.f32 %v303, %v304
        %v306 = vrot.slane %v305, 1
        %v307 = vadd.f32 %v305, %v306
        %v309 = vrot.slane %v299, 4
        %v311 = vsel %vm252, %v309, 0.0
        %v312 = vrot.slane %v311, 4
        %v313 = vadd.f32 %v311, %v312
        %v314 = vrot.slane %v313, 2
        %v315 = vadd.f32 %v313, %v314
        %v316 = vrot.slane %v315, 1
        %v317 = vadd.f32 %v315, %v316
        %v318 = vsel %vm252, %v300, 0.0
        %v319 = vrot.slane %v318, 4
        %v320 = vadd.f32 %v318, %v319
        %v321 = vrot.slane %v320, 2
        %v322 = vadd.f32 %v320, %v321
        %v323 = vrot.slane %v322, 1
        %v324 = vadd.f32 %v322, %v323
        %v326 = vrot.slane %v300, 4
        %v328 = vsel %vm252, %v326, 0.0
        %v329 = vrot.slane %v328, 4
        %v330 = vadd.f32 %v328, %v329
        %v331 = vrot.slane %v330, 2
        %v332 = vadd.f32 %v330, %v331
        %v333 = vrot.slane %v332, 1
        %v334 = vadd.f32 %v332, %v333
        %v335 = vsel %vm252, %v307, %v317
        %v336 = vsel %vm252, %v324, %v334
        %vm337 = vcmp.lt.f32.partialorder %v335, %v287
        %vm338 = vcmp.lt.f32.partialorder %v336, %v288
        %v339 = vsel %vm337, %v335, %v287
        %v340 = vsel %vm338, %v336, %v288
        %v341 = vsel %vm337, 1, 0
        %v342 = vsel %vm338, 1, 0
        %v343 = vsel %vm337, %v291, %v241
        %v344 = vsel %vm338, %v295, %v246
        %345 = vset.pattern.permute.xlu0 2
        %346 = vperm.xlu0 %345, %v234
        %v347 = vpop.permute.xlu0 %346
        %349 = vset.pattern.permute.xlu0 2
        %350 = vperm.xlu0 %349, %v235
        %v351 = vpop.permute.xlu0 %350
        %v353 = vsub.f32 %v236, %v347
        %v354 = vsub.f32 %v237, %v351
        %v355 = vmul.f32 %v353, %v353
        %v356 = vmul.f32 %v354, %v354
        %v357 = vsel %vm252, %v355, 0.0
        %v358 = vrot.slane %v357, 4
        %v359 = vadd.f32 %v357, %v358
        %v360 = vrot.slane %v359, 2
        %v361 = vadd.f32 %v359, %v360
        %v362 = vrot.slane %v361, 1
        %v363 = vadd.f32 %v361, %v362
        %v365 = vrot.slane %v355, 4
        %v367 = vsel %vm252, %v365, 0.0
        %v368 = vrot.slane %v367, 4
        %v369 = vadd.f32 %v367, %v368
        %v370 = vrot.slane %v369, 2
        %v371 = vadd.f32 %v369, %v370
        %v372 = vrot.slane %v371, 1
        %v373 = vadd.f32 %v371, %v372
        %v374 = vsel %vm252, %v356, 0.0
        %v375 = vrot.slane %v374, 4
        %v376 = vadd.f32 %v374, %v375
        %v377 = vrot.slane %v376, 2
        %v378 = vadd.f32 %v376, %v377
        %v379 = vrot.slane %v378, 1
        %v380 = vadd.f32 %v378, %v379
        %v382 = vrot.slane %v356, 4
        %v384 = vsel %vm252, %v382, 0.0
        %v385 = vrot.slane %v384, 4
        %v386 = vadd.f32 %v384, %v385
        %v387 = vrot.slane %v386, 2
        %v388 = vadd.f32 %v386, %v387
        %v389 = vrot.slane %v388, 1
        %v390 = vadd.f32 %v388, %v389
        %v391 = vsel %vm252, %v363, %v373
        %v392 = vsel %vm252, %v380, %v390
        %vm393 = vcmp.lt.f32.partialorder %v391, %v339
        %vm394 = vcmp.lt.f32.partialorder %v392, %v340
        %v395 = vsel %vm393, %v391, %v339
        %v396 = vsel %vm394, %v392, %v340
        %v397 = vsel %vm393, 2, %v341
        %v398 = vsel %vm394, 2, %v342
        %v399 = vsel %vm393, %v347, %v343
        %v400 = vsel %vm394, %v351, %v344
        %401 = vset.pattern.permute.xlu0 3
        %402 = vperm.xlu0 %401, %v234
        %v403 = vpop.permute.xlu0 %402
        %405 = vset.pattern.permute.xlu0 3
        %406 = vperm.xlu0 %405, %v235
        %v407 = vpop.permute.xlu0 %406
        %v409 = vsub.f32 %v236, %v403
        %v410 = vsub.f32 %v237, %v407
        %v411 = vmul.f32 %v409, %v409
        %v412 = vmul.f32 %v410, %v410
        %v413 = vsel %vm252, %v411, 0.0
        %v414 = vrot.slane %v413, 4
        %v415 = vadd.f32 %v413, %v414
        %v416 = vrot.slane %v415, 2
        %v417 = vadd.f32 %v415, %v416
        %v418 = vrot.slane %v417, 1
        %v419 = vadd.f32 %v417, %v418
        %v421 = vrot.slane %v411, 4
        %v423 = vsel %vm252, %v421, 0.0
        %v424 = vrot.slane %v423, 4
        %v425 = vadd.f32 %v423, %v424
        %v426 = vrot.slane %v425, 2
        %v427 = vadd.f32 %v425, %v426
        %v428 = vrot.slane %v427, 1
        %v429 = vadd.f32 %v427, %v428
        %v430 = vsel %vm252, %v412, 0.0
        %v431 = vrot.slane %v430, 4
        %v432 = vadd.f32 %v430, %v431
        %v433 = vrot.slane %v432, 2
        %v434 = vadd.f32 %v432, %v433
        %v435 = vrot.slane %v434, 1
        %v436 = vadd.f32 %v434, %v435
        %v438 = vrot.slane %v412, 4
        %v440 = vsel %vm252, %v438, 0.0
        %v441 = vrot.slane %v440, 4
        %v442 = vadd.f32 %v440, %v441
        %v443 = vrot.slane %v442, 2
        %v444 = vadd.f32 %v442, %v443
        %v445 = vrot.slane %v444, 1
        %v446 = vadd.f32 %v444, %v445
        %v447 = vsel %vm252, %v419, %v429
        %v448 = vsel %vm252, %v436, %v446
        %vm449 = vcmp.lt.f32.partialorder %v447, %v395
        %vm450 = vcmp.lt.f32.partialorder %v448, %v396
        %v451 = vsel %vm449, %v447, %v395
        %v452 = vsel %vm450, %v448, %v396
        %v453 = vsel %vm449, 3, %v397
        %v454 = vsel %vm450, 3, %v398
        %v455 = vsel %vm449, %v403, %v399
        %v456 = vsel %vm450, %v407, %v400
        %457 = vset.pattern.permute.xlu0 4
        %458 = vperm.xlu0 %457, %v234
        %v459 = vpop.permute.xlu0 %458
        %461 = vset.pattern.permute.xlu0 4
        %462 = vperm.xlu0 %461, %v235
        %v463 = vpop.permute.xlu0 %462
        %v465 = vsub.f32 %v236, %v459
        %v466 = vsub.f32 %v237, %v463
        %v467 = vmul.f32 %v465, %v465
        %v468 = vmul.f32 %v466, %v466
        %v469 = vsel %vm252, %v467, 0.0
        %v470 = vrot.slane %v469, 4
        %v471 = vadd.f32 %v469, %v470
        %v472 = vrot.slane %v471, 2
        %v473 = vadd.f32 %v471, %v472
        %v474 = vrot.slane %v473, 1
        %v475 = vadd.f32 %v473, %v474
        %v477 = vrot.slane %v467, 4
        %v479 = vsel %vm252, %v477, 0.0
        %v480 = vrot.slane %v479, 4
        %v481 = vadd.f32 %v479, %v480
        %v482 = vrot.slane %v481, 2
        %v483 = vadd.f32 %v481, %v482
        %v484 = vrot.slane %v483, 1
        %v485 = vadd.f32 %v483, %v484
        %v486 = vsel %vm252, %v468, 0.0
        %v487 = vrot.slane %v486, 4
        %v488 = vadd.f32 %v486, %v487
        %v489 = vrot.slane %v488, 2
        %v490 = vadd.f32 %v488, %v489
        %v491 = vrot.slane %v490, 1
        %v492 = vadd.f32 %v490, %v491
        %v494 = vrot.slane %v468, 4
        %v496 = vsel %vm252, %v494, 0.0
        %v497 = vrot.slane %v496, 4
        %v498 = vadd.f32 %v496, %v497
        %v499 = vrot.slane %v498, 2
        %v500 = vadd.f32 %v498, %v499
        %v501 = vrot.slane %v500, 1
        %v502 = vadd.f32 %v500, %v501
        %v503 = vsel %vm252, %v475, %v485
        %v504 = vsel %vm252, %v492, %v502
        %vm505 = vcmp.lt.f32.partialorder %v503, %v451
        %vm506 = vcmp.lt.f32.partialorder %v504, %v452
        %v507 = vsel %vm505, %v503, %v451
        %v508 = vsel %vm506, %v504, %v452
        %v509 = vsel %vm505, 4, %v453
        %v510 = vsel %vm506, 4, %v454
        %v511 = vsel %vm505, %v459, %v455
        %v512 = vsel %vm506, %v463, %v456
        %513 = vset.pattern.permute.xlu0 5
        %514 = vperm.xlu0 %513, %v234
        %v515 = vpop.permute.xlu0 %514
        %517 = vset.pattern.permute.xlu0 5
        %518 = vperm.xlu0 %517, %v235
        %v519 = vpop.permute.xlu0 %518
        %v521 = vsub.f32 %v236, %v515
        %v522 = vsub.f32 %v237, %v519
        %v523 = vmul.f32 %v521, %v521
        %v524 = vmul.f32 %v522, %v522
        %v525 = vsel %vm252, %v523, 0.0
        %v526 = vrot.slane %v525, 4
        %v527 = vadd.f32 %v525, %v526
        %v528 = vrot.slane %v527, 2
        %v529 = vadd.f32 %v527, %v528
        %v530 = vrot.slane %v529, 1
        %v531 = vadd.f32 %v529, %v530
        %v533 = vrot.slane %v523, 4
        %v535 = vsel %vm252, %v533, 0.0
        %v536 = vrot.slane %v535, 4
        %v537 = vadd.f32 %v535, %v536
        %v538 = vrot.slane %v537, 2
        %v539 = vadd.f32 %v537, %v538
        %v540 = vrot.slane %v539, 1
        %v541 = vadd.f32 %v539, %v540
        %v542 = vsel %vm252, %v524, 0.0
        %v543 = vrot.slane %v542, 4
        %v544 = vadd.f32 %v542, %v543
        %v545 = vrot.slane %v544, 2
        %v546 = vadd.f32 %v544, %v545
        %v547 = vrot.slane %v546, 1
        %v548 = vadd.f32 %v546, %v547
        %v550 = vrot.slane %v524, 4
        %v552 = vsel %vm252, %v550, 0.0
        %v553 = vrot.slane %v552, 4
        %v554 = vadd.f32 %v552, %v553
        %v555 = vrot.slane %v554, 2
        %v556 = vadd.f32 %v554, %v555
        %v557 = vrot.slane %v556, 1
        %v558 = vadd.f32 %v556, %v557
        %v559 = vsel %vm252, %v531, %v541
        %v560 = vsel %vm252, %v548, %v558
        %vm561 = vcmp.lt.f32.partialorder %v559, %v507
        %vm562 = vcmp.lt.f32.partialorder %v560, %v508
        %v563 = vsel %vm561, %v559, %v507
        %v564 = vsel %vm562, %v560, %v508
        %v565 = vsel %vm561, 5, %v509
        %v566 = vsel %vm562, 5, %v510
        %v567 = vsel %vm561, %v515, %v511
        %v568 = vsel %vm562, %v519, %v512
        %569 = vset.pattern.permute.xlu0 6
        %570 = vperm.xlu0 %569, %v234
        %v571 = vpop.permute.xlu0 %570
        %573 = vset.pattern.permute.xlu0 6
        %574 = vperm.xlu0 %573, %v235
        %v575 = vpop.permute.xlu0 %574
        %v577 = vsub.f32 %v236, %v571
        %v578 = vsub.f32 %v237, %v575
        %v579 = vmul.f32 %v577, %v577
        %v580 = vmul.f32 %v578, %v578
        %v581 = vsel %vm252, %v579, 0.0
        %v582 = vrot.slane %v581, 4
        %v583 = vadd.f32 %v581, %v582
        %v584 = vrot.slane %v583, 2
        %v585 = vadd.f32 %v583, %v584
        %v586 = vrot.slane %v585, 1
        %v587 = vadd.f32 %v585, %v586
        %v589 = vrot.slane %v579, 4
        %v591 = vsel %vm252, %v589, 0.0
        %v592 = vrot.slane %v591, 4
        %v593 = vadd.f32 %v591, %v592
        %v594 = vrot.slane %v593, 2
        %v595 = vadd.f32 %v593, %v594
        %v596 = vrot.slane %v595, 1
        %v597 = vadd.f32 %v595, %v596
        %v598 = vsel %vm252, %v580, 0.0
        %v599 = vrot.slane %v598, 4
        %v600 = vadd.f32 %v598, %v599
        %v601 = vrot.slane %v600, 2
        %v602 = vadd.f32 %v600, %v601
        %v603 = vrot.slane %v602, 1
        %v604 = vadd.f32 %v602, %v603
        %v606 = vrot.slane %v580, 4
        %v608 = vsel %vm252, %v606, 0.0
        %v609 = vrot.slane %v608, 4
        %v610 = vadd.f32 %v608, %v609
        %v611 = vrot.slane %v610, 2
        %v612 = vadd.f32 %v610, %v611
        %v613 = vrot.slane %v612, 1
        %v614 = vadd.f32 %v612, %v613
        %v615 = vsel %vm252, %v587, %v597
        %v616 = vsel %vm252, %v604, %v614
        %vm617 = vcmp.lt.f32.partialorder %v615, %v563
        %vm618 = vcmp.lt.f32.partialorder %v616, %v564
        %v619 = vsel %vm617, %v615, %v563
        %v620 = vsel %vm618, %v616, %v564
        %v621 = vsel %vm617, 6, %v565
        %v622 = vsel %vm618, 6, %v566
        %v623 = vsel %vm617, %v571, %v567
        %v624 = vsel %vm618, %v575, %v568
        %625 = vset.pattern.permute.xlu0 7
        %626 = vperm.xlu0 %625, %v234
        %v627 = vpop.permute.xlu0 %626
        %629 = vset.pattern.permute.xlu0 7
        %630 = vperm.xlu0 %629, %v235
        %v631 = vpop.permute.xlu0 %630
        %v633 = vsub.f32 %v236, %v627
        %v634 = vsub.f32 %v237, %v631
        %v635 = vmul.f32 %v633, %v633
        %v636 = vmul.f32 %v634, %v634
        %v637 = vsel %vm252, %v635, 0.0
        %v638 = vrot.slane %v637, 4
        %v639 = vadd.f32 %v637, %v638
        %v640 = vrot.slane %v639, 2
        %v641 = vadd.f32 %v639, %v640
        %v642 = vrot.slane %v641, 1
        %v643 = vadd.f32 %v641, %v642
        %v645 = vrot.slane %v635, 4
        %v647 = vsel %vm252, %v645, 0.0
        %v648 = vrot.slane %v647, 4
        %v649 = vadd.f32 %v647, %v648
        %v650 = vrot.slane %v649, 2
        %v651 = vadd.f32 %v649, %v650
        %v652 = vrot.slane %v651, 1
        %v653 = vadd.f32 %v651, %v652
        %v654 = vsel %vm252, %v636, 0.0
        %v655 = vrot.slane %v654, 4
        %v656 = vadd.f32 %v654, %v655
        %v657 = vrot.slane %v656, 2
        %v658 = vadd.f32 %v656, %v657
        %v659 = vrot.slane %v658, 1
        %v660 = vadd.f32 %v658, %v659
        %v662 = vrot.slane %v636, 4
        %v664 = vsel %vm252, %v662, 0.0
        %v665 = vrot.slane %v664, 4
        %v666 = vadd.f32 %v664, %v665
        %v667 = vrot.slane %v666, 2
        %v668 = vadd.f32 %v666, %v667
        %v669 = vrot.slane %v668, 1
        %v670 = vadd.f32 %v668, %v669
        %v671 = vsel %vm252, %v643, %v653
        %v672 = vsel %vm252, %v660, %v670
        %vm673 = vcmp.lt.f32.partialorder %v671, %v619
        %vm674 = vcmp.lt.f32.partialorder %v672, %v620
        %v675 = vsel %vm673, %v671, %v619
        %v676 = vsel %vm674, %v672, %v620
        %v677 = vsel %vm673, 7, %v621
        %v678 = vsel %vm674, 7, %v622
        %v679 = vsel %vm673, %v627, %v623
        %v680 = vsel %vm674, %v631, %v624
        %681 = vset.pattern.permute.xlu0 8
        %682 = vperm.xlu0 %681, %v234
        %v683 = vpop.permute.xlu0 %682
        %685 = vset.pattern.permute.xlu0 8
        %686 = vperm.xlu0 %685, %v235
        %v687 = vpop.permute.xlu0 %686
        %v689 = vsub.f32 %v236, %v683
        %v690 = vsub.f32 %v237, %v687
        %v691 = vmul.f32 %v689, %v689
        %v692 = vmul.f32 %v690, %v690
        %v693 = vsel %vm252, %v691, 0.0
        %v694 = vrot.slane %v693, 4
        %v695 = vadd.f32 %v693, %v694
        %v696 = vrot.slane %v695, 2
        %v697 = vadd.f32 %v695, %v696
        %v698 = vrot.slane %v697, 1
        %v699 = vadd.f32 %v697, %v698
        %v701 = vrot.slane %v691, 4
        %v703 = vsel %vm252, %v701, 0.0
        %v704 = vrot.slane %v703, 4
        %v705 = vadd.f32 %v703, %v704
        %v706 = vrot.slane %v705, 2
        %v707 = vadd.f32 %v705, %v706
        %v708 = vrot.slane %v707, 1
        %v709 = vadd.f32 %v707, %v708
        %v710 = vsel %vm252, %v692, 0.0
        %v711 = vrot.slane %v710, 4
        %v712 = vadd.f32 %v710, %v711
        %v713 = vrot.slane %v712, 2
        %v714 = vadd.f32 %v712, %v713
        %v715 = vrot.slane %v714, 1
        %v716 = vadd.f32 %v714, %v715
        %v718 = vrot.slane %v692, 4
        %v720 = vsel %vm252, %v718, 0.0
        %v721 = vrot.slane %v720, 4
        %v722 = vadd.f32 %v720, %v721
        %v723 = vrot.slane %v722, 2
        %v724 = vadd.f32 %v722, %v723
        %v725 = vrot.slane %v724, 1
        %v726 = vadd.f32 %v724, %v725
        %v727 = vsel %vm252, %v699, %v709
        %v728 = vsel %vm252, %v716, %v726
        %vm729 = vcmp.lt.f32.partialorder %v727, %v675
        %vm730 = vcmp.lt.f32.partialorder %v728, %v676
        %v731 = vsel %vm729, %v727, %v675
        %v732 = vsel %vm730, %v728, %v676
        %v733 = vsel %vm729, 8, %v677
        %v734 = vsel %vm730, 8, %v678
        %v735 = vsel %vm729, %v683, %v679
        %v736 = vsel %vm730, %v687, %v680
        %737 = vset.pattern.permute.xlu0 9
        %738 = vperm.xlu0 %737, %v234
        %v739 = vpop.permute.xlu0 %738
        %741 = vset.pattern.permute.xlu0 9
        %742 = vperm.xlu0 %741, %v235
        %v743 = vpop.permute.xlu0 %742
        %v745 = vsub.f32 %v236, %v739
        %v746 = vsub.f32 %v237, %v743
        %v747 = vmul.f32 %v745, %v745
        %v748 = vmul.f32 %v746, %v746
        %v749 = vsel %vm252, %v747, 0.0
        %v750 = vrot.slane %v749, 4
        %v751 = vadd.f32 %v749, %v750
        %v752 = vrot.slane %v751, 2
        %v753 = vadd.f32 %v751, %v752
        %v754 = vrot.slane %v753, 1
        %v755 = vadd.f32 %v753, %v754
        %v757 = vrot.slane %v747, 4
        %v759 = vsel %vm252, %v757, 0.0
        %v760 = vrot.slane %v759, 4
        %v761 = vadd.f32 %v759, %v760
        %v762 = vrot.slane %v761, 2
        %v763 = vadd.f32 %v761, %v762
        %v764 = vrot.slane %v763, 1
        %v765 = vadd.f32 %v763, %v764
        %v766 = vsel %vm252, %v748, 0.0
        %v767 = vrot.slane %v766, 4
        %v768 = vadd.f32 %v766, %v767
        %v769 = vrot.slane %v768, 2
        %v770 = vadd.f32 %v768, %v769
        %v771 = vrot.slane %v770, 1
        %v772 = vadd.f32 %v770, %v771
        %v774 = vrot.slane %v748, 4
        %v776 = vsel %vm252, %v774, 0.0
        %v777 = vrot.slane %v776, 4
        %v778 = vadd.f32 %v776, %v777
        %v779 = vrot.slane %v778, 2
        %v780 = vadd.f32 %v778, %v779
        %v781 = vrot.slane %v780, 1
        %v782 = vadd.f32 %v780, %v781
        %v783 = vsel %vm252, %v755, %v765
        %v784 = vsel %vm252, %v772, %v782
        %vm785 = vcmp.lt.f32.partialorder %v783, %v731
        %vm786 = vcmp.lt.f32.partialorder %v784, %v732
        %v787 = vsel %vm785, %v783, %v731
        %v788 = vsel %vm786, %v784, %v732
        %v789 = vsel %vm785, 9, %v733
        %v790 = vsel %vm786, 9, %v734
        %v791 = vsel %vm785, %v739, %v735
        %v792 = vsel %vm786, %v743, %v736
        %793 = vset.pattern.permute.xlu0 10
        %794 = vperm.xlu0 %793, %v234
        %v795 = vpop.permute.xlu0 %794
        %797 = vset.pattern.permute.xlu0 10
        %798 = vperm.xlu0 %797, %v235
        %v799 = vpop.permute.xlu0 %798
        %v801 = vsub.f32 %v236, %v795
        %v802 = vsub.f32 %v237, %v799
        %v803 = vmul.f32 %v801, %v801
        %v804 = vmul.f32 %v802, %v802
        %v805 = vsel %vm252, %v803, 0.0
        %v806 = vrot.slane %v805, 4
        %v807 = vadd.f32 %v805, %v806
        %v808 = vrot.slane %v807, 2
        %v809 = vadd.f32 %v807, %v808
        %v810 = vrot.slane %v809, 1
        %v811 = vadd.f32 %v809, %v810
        %v813 = vrot.slane %v803, 4
        %v815 = vsel %vm252, %v813, 0.0
        %v816 = vrot.slane %v815, 4
        %v817 = vadd.f32 %v815, %v816
        %v818 = vrot.slane %v817, 2
        %v819 = vadd.f32 %v817, %v818
        %v820 = vrot.slane %v819, 1
        %v821 = vadd.f32 %v819, %v820
        %v822 = vsel %vm252, %v804, 0.0
        %v823 = vrot.slane %v822, 4
        %v824 = vadd.f32 %v822, %v823
        %v825 = vrot.slane %v824, 2
        %v826 = vadd.f32 %v824, %v825
        %v827 = vrot.slane %v826, 1
        %v828 = vadd.f32 %v826, %v827
        %v830 = vrot.slane %v804, 4
        %v832 = vsel %vm252, %v830, 0.0
        %v833 = vrot.slane %v832, 4
        %v834 = vadd.f32 %v832, %v833
        %v835 = vrot.slane %v834, 2
        %v836 = vadd.f32 %v834, %v835
        %v837 = vrot.slane %v836, 1
        %v838 = vadd.f32 %v836, %v837
        %v839 = vsel %vm252, %v811, %v821
        %v840 = vsel %vm252, %v828, %v838
        %vm841 = vcmp.lt.f32.partialorder %v839, %v787
        %vm842 = vcmp.lt.f32.partialorder %v840, %v788
        %v843 = vsel %vm841, %v839, %v787
        %v844 = vsel %vm842, %v840, %v788
        %v845 = vsel %vm841, 10, %v789
        %v846 = vsel %vm842, 10, %v790
        %v847 = vsel %vm841, %v795, %v791
        %v848 = vsel %vm842, %v799, %v792
        %849 = vset.pattern.permute.xlu0 11
        %850 = vperm.xlu0 %849, %v234
        %v851 = vpop.permute.xlu0 %850
        %853 = vset.pattern.permute.xlu0 11
        %854 = vperm.xlu0 %853, %v235
        %v855 = vpop.permute.xlu0 %854
        %v857 = vsub.f32 %v236, %v851
        %v858 = vsub.f32 %v237, %v855
        %v859 = vmul.f32 %v857, %v857
        %v860 = vmul.f32 %v858, %v858
        %v861 = vsel %vm252, %v859, 0.0
        %v862 = vrot.slane %v861, 4
        %v863 = vadd.f32 %v861, %v862
        %v864 = vrot.slane %v863, 2
        %v865 = vadd.f32 %v863, %v864
        %v866 = vrot.slane %v865, 1
        %v867 = vadd.f32 %v865, %v866
        %v869 = vrot.slane %v859, 4
        %v871 = vsel %vm252, %v869, 0.0
        %v872 = vrot.slane %v871, 4
        %v873 = vadd.f32 %v871, %v872
        %v874 = vrot.slane %v873, 2
        %v875 = vadd.f32 %v873, %v874
        %v876 = vrot.slane %v875, 1
        %v877 = vadd.f32 %v875, %v876
        %v878 = vsel %vm252, %v860, 0.0
        %v879 = vrot.slane %v878, 4
        %v880 = vadd.f32 %v878, %v879
        %v881 = vrot.slane %v880, 2
        %v882 = vadd.f32 %v880, %v881
        %v883 = vrot.slane %v882, 1
        %v884 = vadd.f32 %v882, %v883
        %v886 = vrot.slane %v860, 4
        %v888 = vsel %vm252, %v886, 0.0
        %v889 = vrot.slane %v888, 4
        %v890 = vadd.f32 %v888, %v889
        %v891 = vrot.slane %v890, 2
        %v892 = vadd.f32 %v890, %v891
        %v893 = vrot.slane %v892, 1
        %v894 = vadd.f32 %v892, %v893
        %v895 = vsel %vm252, %v867, %v877
        %v896 = vsel %vm252, %v884, %v894
        %vm897 = vcmp.lt.f32.partialorder %v895, %v843
        %vm898 = vcmp.lt.f32.partialorder %v896, %v844
        %v899 = vsel %vm897, %v895, %v843
        %v900 = vsel %vm898, %v896, %v844
        %v901 = vsel %vm897, 11, %v845
        %v902 = vsel %vm898, 11, %v846
        %v903 = vsel %vm897, %v851, %v847
        %v904 = vsel %vm898, %v855, %v848
        %905 = vset.pattern.permute.xlu0 12
        %906 = vperm.xlu0 %905, %v234
        %v907 = vpop.permute.xlu0 %906
        %909 = vset.pattern.permute.xlu0 12
        %910 = vperm.xlu0 %909, %v235
        %v911 = vpop.permute.xlu0 %910
        %v913 = vsub.f32 %v236, %v907
        %v914 = vsub.f32 %v237, %v911
        %v915 = vmul.f32 %v913, %v913
        %v916 = vmul.f32 %v914, %v914
        %v917 = vsel %vm252, %v915, 0.0
        %v918 = vrot.slane %v917, 4
        %v919 = vadd.f32 %v917, %v918
        %v920 = vrot.slane %v919, 2
        %v921 = vadd.f32 %v919, %v920
        %v922 = vrot.slane %v921, 1
        %v923 = vadd.f32 %v921, %v922
        %v925 = vrot.slane %v915, 4
        %v927 = vsel %vm252, %v925, 0.0
        %v928 = vrot.slane %v927, 4
        %v929 = vadd.f32 %v927, %v928
        %v930 = vrot.slane %v929, 2
        %v931 = vadd.f32 %v929, %v930
        %v932 = vrot.slane %v931, 1
        %v933 = vadd.f32 %v931, %v932
        %v934 = vsel %vm252, %v916, 0.0
        %v935 = vrot.slane %v934, 4
        %v936 = vadd.f32 %v934, %v935
        %v937 = vrot.slane %v936, 2
        %v938 = vadd.f32 %v936, %v937
        %v939 = vrot.slane %v938, 1
        %v940 = vadd.f32 %v938, %v939
        %v942 = vrot.slane %v916, 4
        %v944 = vsel %vm252, %v942, 0.0
        %v945 = vrot.slane %v944, 4
        %v946 = vadd.f32 %v944, %v945
        %v947 = vrot.slane %v946, 2
        %v948 = vadd.f32 %v946, %v947
        %v949 = vrot.slane %v948, 1
        %v950 = vadd.f32 %v948, %v949
        %v951 = vsel %vm252, %v923, %v933
        %v952 = vsel %vm252, %v940, %v950
        %vm953 = vcmp.lt.f32.partialorder %v951, %v899
        %vm954 = vcmp.lt.f32.partialorder %v952, %v900
        %v955 = vsel %vm953, %v951, %v899
        %v956 = vsel %vm954, %v952, %v900
        %v957 = vsel %vm953, 12, %v901
        %v958 = vsel %vm954, 12, %v902
        %v959 = vsel %vm953, %v907, %v903
        %v960 = vsel %vm954, %v911, %v904
        %961 = vset.pattern.permute.xlu0 13
        %962 = vperm.xlu0 %961, %v234
        %v963 = vpop.permute.xlu0 %962
        %965 = vset.pattern.permute.xlu0 13
        %966 = vperm.xlu0 %965, %v235
        %v967 = vpop.permute.xlu0 %966
        %v969 = vsub.f32 %v236, %v963
        %v970 = vsub.f32 %v237, %v967
        %v971 = vmul.f32 %v969, %v969
        %v972 = vmul.f32 %v970, %v970
        %v973 = vsel %vm252, %v971, 0.0
        %v974 = vrot.slane %v973, 4
        %v975 = vadd.f32 %v973, %v974
        %v976 = vrot.slane %v975, 2
        %v977 = vadd.f32 %v975, %v976
        %v978 = vrot.slane %v977, 1
        %v979 = vadd.f32 %v977, %v978
        %v981 = vrot.slane %v971, 4
        %v983 = vsel %vm252, %v981, 0.0
        %v984 = vrot.slane %v983, 4
        %v985 = vadd.f32 %v983, %v984
        %v986 = vrot.slane %v985, 2
        %v987 = vadd.f32 %v985, %v986
        %v988 = vrot.slane %v987, 1
        %v989 = vadd.f32 %v987, %v988
        %v990 = vsel %vm252, %v972, 0.0
        %v991 = vrot.slane %v990, 4
        %v992 = vadd.f32 %v990, %v991
        %v993 = vrot.slane %v992, 2
        %v994 = vadd.f32 %v992, %v993
        %v995 = vrot.slane %v994, 1
        %v996 = vadd.f32 %v994, %v995
        %v998 = vrot.slane %v972, 4
        %v1000 = vsel %vm252, %v998, 0.0
        %v1001 = vrot.slane %v1000, 4
        %v1002 = vadd.f32 %v1000, %v1001
        %v1003 = vrot.slane %v1002, 2
        %v1004 = vadd.f32 %v1002, %v1003
        %v1005 = vrot.slane %v1004, 1
        %v1006 = vadd.f32 %v1004, %v1005
        %v1007 = vsel %vm252, %v979, %v989
        %v1008 = vsel %vm252, %v996, %v1006
        %vm1009 = vcmp.lt.f32.partialorder %v1007, %v955
        %vm1010 = vcmp.lt.f32.partialorder %v1008, %v956
        %v1011 = vsel %vm1009, %v1007, %v955
        %v1012 = vsel %vm1010, %v1008, %v956
        %v1013 = vsel %vm1009, 13, %v957
        %v1014 = vsel %vm1010, 13, %v958
        %v1015 = vsel %vm1009, %v963, %v959
        %v1016 = vsel %vm1010, %v967, %v960
        %1017 = vset.pattern.permute.xlu0 14
        %1018 = vperm.xlu0 %1017, %v234
        %v1019 = vpop.permute.xlu0 %1018
        %1021 = vset.pattern.permute.xlu0 14
        %1022 = vperm.xlu0 %1021, %v235
        %v1023 = vpop.permute.xlu0 %1022
        %v1025 = vsub.f32 %v236, %v1019
        %v1026 = vsub.f32 %v237, %v1023
        %v1027 = vmul.f32 %v1025, %v1025
        %v1028 = vmul.f32 %v1026, %v1026
        %v1029 = vsel %vm252, %v1027, 0.0
        %v1030 = vrot.slane %v1029, 4
        %v1031 = vadd.f32 %v1029, %v1030
        %v1032 = vrot.slane %v1031, 2
        %v1033 = vadd.f32 %v1031, %v1032
        %v1034 = vrot.slane %v1033, 1
        %v1035 = vadd.f32 %v1033, %v1034
        %v1037 = vrot.slane %v1027, 4
        %v1039 = vsel %vm252, %v1037, 0.0
        %v1040 = vrot.slane %v1039, 4
        %v1041 = vadd.f32 %v1039, %v1040
        %v1042 = vrot.slane %v1041, 2
        %v1043 = vadd.f32 %v1041, %v1042
        %v1044 = vrot.slane %v1043, 1
        %v1045 = vadd.f32 %v1043, %v1044
        %v1046 = vsel %vm252, %v1028, 0.0
        %v1047 = vrot.slane %v1046, 4
        %v1048 = vadd.f32 %v1046, %v1047
        %v1049 = vrot.slane %v1048, 2
        %v1050 = vadd.f32 %v1048, %v1049
        %v1051 = vrot.slane %v1050, 1
        %v1052 = vadd.f32 %v1050, %v1051
        %v1054 = vrot.slane %v1028, 4
        %v1056 = vsel %vm252, %v1054, 0.0
        %v1057 = vrot.slane %v1056, 4
        %v1058 = vadd.f32 %v1056, %v1057
        %v1059 = vrot.slane %v1058, 2
        %v1060 = vadd.f32 %v1058, %v1059
        %v1061 = vrot.slane %v1060, 1
        %v1062 = vadd.f32 %v1060, %v1061
        %v1063 = vsel %vm252, %v1035, %v1045
        %v1064 = vsel %vm252, %v1052, %v1062
        %vm1065 = vcmp.lt.f32.partialorder %v1063, %v1011
        %vm1066 = vcmp.lt.f32.partialorder %v1064, %v1012
        %v1067 = vsel %vm1065, %v1063, %v1011
        %v1068 = vsel %vm1066, %v1064, %v1012
        %v1069 = vsel %vm1065, 14, %v1013
        %v1070 = vsel %vm1066, 14, %v1014
        %v1071 = vsel %vm1065, %v1019, %v1015
        %v1072 = vsel %vm1066, %v1023, %v1016
        %1073 = vset.pattern.permute.xlu0 15
        %1074 = vperm.xlu0 %1073, %v234
        %v1075 = vpop.permute.xlu0 %1074
        %1077 = vset.pattern.permute.xlu0 15
        %1078 = vperm.xlu0 %1077, %v235
        %v1079 = vpop.permute.xlu0 %1078
        %v1081 = vsub.f32 %v236, %v1075
        %v1082 = vsub.f32 %v237, %v1079
        %v1083 = vmul.f32 %v1081, %v1081
        %v1084 = vmul.f32 %v1082, %v1082
        %v1085 = vsel %vm252, %v1083, 0.0
        %v1086 = vrot.slane %v1085, 4
        %v1087 = vadd.f32 %v1085, %v1086
        %v1088 = vrot.slane %v1087, 2
        %v1089 = vadd.f32 %v1087, %v1088
        %v1090 = vrot.slane %v1089, 1
        %v1091 = vadd.f32 %v1089, %v1090
        %v1093 = vrot.slane %v1083, 4
        %v1095 = vsel %vm252, %v1093, 0.0
        %v1096 = vrot.slane %v1095, 4
        %v1097 = vadd.f32 %v1095, %v1096
        %v1098 = vrot.slane %v1097, 2
        %v1099 = vadd.f32 %v1097, %v1098
        %v1100 = vrot.slane %v1099, 1
        %v1101 = vadd.f32 %v1099, %v1100
        %v1102 = vsel %vm252, %v1084, 0.0
        %v1103 = vrot.slane %v1102, 4
        %v1104 = vadd.f32 %v1102, %v1103
        %v1105 = vrot.slane %v1104, 2
        %v1106 = vadd.f32 %v1104, %v1105
        %v1107 = vrot.slane %v1106, 1
        %v1108 = vadd.f32 %v1106, %v1107
        %v1110 = vrot.slane %v1084, 4
        %v1112 = vsel %vm252, %v1110, 0.0
        %v1113 = vrot.slane %v1112, 4
        %v1114 = vadd.f32 %v1112, %v1113
        %v1115 = vrot.slane %v1114, 2
        %v1116 = vadd.f32 %v1114, %v1115
        %v1117 = vrot.slane %v1116, 1
        %v1118 = vadd.f32 %v1116, %v1117
        %v1119 = vsel %vm252, %v1091, %v1101
        %v1120 = vsel %vm252, %v1108, %v1118
        %vm1121 = vcmp.lt.f32.partialorder %v1119, %v1067
        %vm1122 = vcmp.lt.f32.partialorder %v1120, %v1068
        %v1123 = vsel %vm1121, 15, %v1069
        %v1124 = vsel %vm1122, 15, %v1070
        %v1125 = vsel %vm1121, %v1075, %v1071
        %v1126 = vsel %vm1122, %v1079, %v1072
        %1127 = vst [vmem:[%s226] sm:$0xff] %v1125
        %1128 = vst [vmem:[%s226 + $0x8] sm:$0xff] %v1126
        %1129 = vst [vmem:[%s233] sm:$0x1] %v1123
        %1130 = vst [vmem:[%s233 - $0x3] sm:$0x10] %v1123
        %1131 = vst [vmem:[%s233 + $0x2] sm:$0x1] %v1124
        %1132 = vst [vmem:[%s233 - $0x1] sm:$0x10] %v1124
        %s1133 = sand.u32 %s96, 1
        %s1134 = scalar_lea.sflag [#allocation4], %s1133
        %s1135 = sand.u32 %s96, 1
        %s1136 = smul.addr %s1135, 16
        %s1137 = scalar_lea.vmem [#allocation7], %s1136
        %s1138 = sand.u32 %s124, 1
        %s1139 = scalar_lea.sflag [#allocation9], %s1138
        %s1140 = sand.u32 %s124, 1
        %s1141 = smul.addr %s1140, 4
        %s1142 = scalar_lea.vmem [#allocation8], %s1141
        // Predicated region
        $region37: #{tpu_custom_call.1} parent=27 // pred_check
          %p1143 = pneg %p106
        $region38: #{tpu_custom_call.1} parent=27 // pred_check_branch
          %1145 = sbr.rel (%p1143) target = $region40
        $region39: #{tpu_custom_call.1} parent=27 // pred_region
          %s1147 = ssub.s32 256, 256
          %1148 = vsyncadd %s1134, %s1147
          %s1149 = smul.addr %s29, 2
          %s1150 = sadd.s32 %s30, %s1149
          %s1151 = smul.addr %s1150, 128
          %s1152 = scalar_lea.hbm %s2, %s1151
          %s1153 = sshll.u32 %s1137, 4
          %s1154 = int_to_ptr.vmem [resolvable:$true] %s1153
          %1159 = dma.vmem_to_hbm [thread:$0]  %s1154, 256, %s1152, %s1134, 128, 128, 8
        $region40: #{tpu_custom_call.1} parent=27 // pred_fallthru
          _
        // Predicated region
        $region41: #{tpu_custom_call.1} parent=27 // pred_check
          %p1160 = pneg %p134
        $region42: #{tpu_custom_call.1} parent=27 // pred_check_branch
          %1162 = sbr.rel (%p1160) target = $region44
        $region43: #{tpu_custom_call.1} parent=27 // pred_region
          %s1164 = ssub.s32 64, 64
          %1165 = vsyncadd %s1139, %s1164
          %s1166 = sadd.s32 %s30, %s29
          %s1167 = smul.addr %s1166, 64
          %s1168 = scalar_lea.hbm %s3, %s1167
          %s1170 = sshll.u32 %s1142, 4
          %s1171 = int_to_ptr.vmem [resolvable:$true] %s1170
          %1173 = dma.vmem_to_hbm [thread:$0]  %s1171, 64, %s1168, %s1139
        $region44: #{tpu_custom_call.1} parent=27 // pred_fallthru
          _
      $region28: #{tpu_custom_call.1} parent=5 // pred_fallthru
        _
      %p1174 = scmp.le.s32.totalorder 2, %s20
      // Predicated region
      $region45: #{tpu_custom_call.1} parent=5 // pred_check
        %p1175 = pneg %p1174
      $region46: #{tpu_custom_call.1} parent=5 // pred_check_branch
        %1177 = sbr.rel (%p1175) target = $region48
      $region47: #{tpu_custom_call.1} parent=5 // pred_region
        %s1178 = ssub.s32 %s20, 2
        // Predicated region
        $region49: #{tpu_custom_call.1} parent=47 // pred_check
          %p1179 = pneg %p112
        $region50: #{tpu_custom_call.1} parent=47 // pred_check_branch
          %1181 = sbr.rel (%p1179) target = $region52
        $region51: #{tpu_custom_call.1} parent=47 // pred_region
          %s1182 = sand.u32 %s97, 1
          %s1183 = scalar_lea.sflag [#allocation4], %s1182
          %s1184 = sand.u32 %s97, 1
          %s1185 = smul.addr %s1184, 16
          %s1186 = scalar_lea.vmem [#allocation7], %s1185
          %1187 = dma.done %s1183, 256
        $region52: #{tpu_custom_call.1} parent=47 // pred_fallthru
          _
        // Predicated region
        $region53: #{tpu_custom_call.1} parent=47 // pred_check
          %p1188 = pneg %p140
        $region54: #{tpu_custom_call.1} parent=47 // pred_check_branch
          %1190 = sbr.rel (%p1188) target = $region56
        $region55: #{tpu_custom_call.1} parent=47 // pred_region
          %s1191 = sand.u32 %s125, 1
          %s1192 = scalar_lea.sflag [#allocation9], %s1191
          %s1193 = sand.u32 %s125, 1
          %s1194 = smul.addr %s1193, 4
          %s1195 = scalar_lea.vmem [#allocation8], %s1194
          %1196 = dma.done %s1192, 64
        $region56: #{tpu_custom_call.1} parent=47 // pred_fallthru
          _
      $region48: #{tpu_custom_call.1} parent=5 // pred_fallthru
        _
    $region6: #{tpu_custom_call.1} parent=1 // loop_footer
      %s24 = sadd.s32 1, %s20
    $region7: #{tpu_custom_call.1} parent=1 // loop_footer_branch
      %19 = sbr.rel target = $region3
    $region8: #{tpu_custom_call.1} parent=1 // loop_exit
      _
    %1197 = vsyncpa [#allocation3], 1
    %s1198 = scalar_lea.sflag [#allocation3], 1
    %1199 = vsyncpa %s1198, 1
    %1200 = vsyncpa [#allocation6], 1
    %1201 = vsyncpa [#allocation4], 1
    %s1202 = scalar_lea.sflag [#allocation4], 1
    %1203 = vsyncpa %s1202, 1
    %1204 = vsyncpa [#allocation9], 1
    %s1205 = scalar_lea.sflag [#allocation9], 1
    %1206 = vsyncpa %s1205, 1

</llo_original>
